<compile_context>
chip_gen: v5e
topology: v5e:2x2
jax: 0.10.0
libtpu: 0.0.40
codegen_flags: <defaults>
</compile_context>

<pallas_src>
import functools

import jax
import jax.numpy as jnp
import numpy as np
from jax.experimental import pallas as pl
from jax.experimental.pallas import tpu as pltpu


# ----------------------------------------------------------------------------
# Fused kernel: GRU recurrence (fused-gate) -> avg pooling in H-space ->
#               output projection -> prediction MLP.
#
# PyTorch GRU semantics (single layer, batch_first):
#   r = sigmoid(x W_ir^T + b_ir + h W_hr^T + b_hr)
#   z = sigmoid(x W_iz^T + b_iz + h W_hz^T + b_hz)
#   n = tanh   (x W_in^T + b_in + r * (h W_hn^T + b_hn))
#   h' = (1 - z) * n + z * h
# output_linear applied after pooling (valid by linearity of the average).
# ----------------------------------------------------------------------------
def fused_gru_pool_mlp_kernel(x_ref, w_ih_ref, w_hh_ref, b_ih_ref, b_hh_ref,
                              a_ref, mask_ref, w_out_ref, b_out_ref,
                              w1_ref, w2_ref, news_ref, res_ref):
    E, T, F = x_ref.shape
    H = w_hh_ref.shape[0]

    # Hoist all weight / bias loads (and their broadcasts) out of the loop.
    x_all = x_ref[...]                       # [E, T, F]
    w_ih = w_ih_ref[...]                     # [F, 3H]  (gate order r, z, n)
    w_hh = w_hh_ref[...]                     # [H, 3H]
    b_i = b_ih_ref[...]                      # [1, 3H]
    b_h = b_hh_ref[...]                      # [1, 3H]

    h = jnp.zeros((E, H), jnp.float32)
    hs = []
    # Static unroll — T is small here.  For large T use lax.fori_loop with a
    # [T, E, H] VMEM scratch written via dynamic first-axis indexing.
    for t in range(T):
        x_t = x_all[:, t, :]                                        # [E, F]
        gi = jnp.dot(x_t, w_ih, preferred_element_type=jnp.float32) + b_i
        gh = jnp.dot(h, w_hh, preferred_element_type=jnp.float32) + b_h
        r = jax.nn.sigmoid(gi[:, :H] + gh[:, :H])
        z = jax.nn.sigmoid(gi[:, H:2 * H] + gh[:, H:2 * H])
        n = jnp.tanh(gi[:, 2 * H:] + r * gh[:, 2 * H:])
        h = (1.0 - z) * n + z * h
        hs.append(h)

    # Time-major flattening (index t*E + e) -> pure sublane concatenation.
    hid_flat = jnp.concatenate(hs, axis=0)                          # [T*E, H]

    # Average pooling per news node, done in H-space.
    pooled = jnp.dot(a_ref[...], hid_flat,
                     preferred_element_type=jnp.float32)            # [N, H]

    # Output projection applied once; empty news rows forced back to zero.
    news = (jnp.dot(pooled, w_out_ref[...],
                    preferred_element_type=jnp.float32)
            + b_out_ref[...]) * mask_ref[...]                       # [N, F]
    news_ref[...] = news

    # Prediction MLP: linear1 (no bias) -> sigmoid -> linear2 (no bias,
    # zero-padded to 128 output lanes for a dense store).
    h1 = jax.nn.sigmoid(jnp.dot(news, w1_ref[...],
                                preferred_element_type=jnp.float32))  # [N, 2F]
    res_ref[...] = jnp.dot(h1, w2_ref[...],
                           preferred_element_type=jnp.float32)        # [N, 128]


def fused_forward(x, w_ih_cat, w_hh_cat, b_ih_cat, b_hh_cat,
                  a_scaled, mask, w_out, b_out, w1, w2_pad):
    E, T, F = x.shape
    N = a_scaled.shape[0]
    P = w2_pad.shape[1]

    def full(shape):
        return pl.BlockSpec(shape, lambda i: tuple(0 for _ in shape))

    return pl.pallas_call(
        fused_gru_pool_mlp_kernel,
        out_shape=(jax.ShapeDtypeStruct((N, F), jnp.float32),
                   jax.ShapeDtypeStruct((N, P), jnp.float32)),
        grid_spec=pltpu.PrefetchScalarGridSpec(
            num_scalar_prefetch=0,
            grid=(1,),
            in_specs=[
                full(x.shape),            # entity_seq [E, T, F] (batch-first)
                full(w_ih_cat.shape),     # [F, 3H]
                full(w_hh_cat.shape),     # [H, 3H]
                full(b_ih_cat.shape),     # [1, 3H]
                full(b_hh_cat.shape),     # [1, 3H]
                full(a_scaled.shape),     # [N, T*E] scaled assignment
                full(mask.shape),         # [N, 1]  (count > 0)
                full(w_out.shape),        # [H, F]
                full(b_out.shape),        # [1, F]
                full(w1.shape),           # [F, 2F]
                full(w2_pad.shape),       # [2F, 128]
            ],
            out_specs=[full((N, F)), full((N, P))],
        ),
        compiler_params=pltpu.CompilerParams(
            dimension_semantics=("arbitrary",)),
    )(x, w_ih_cat, w_hh_cat, b_ih_cat, b_hh_cat,
      a_scaled, mask, w_out, b_out, w1, w2_pad)


# ----------------------------------------------------------------------------
# Module wrapper (cheap glue only: weight concatenation, assignment matrix,
# result-column slice).
# ----------------------------------------------------------------------------
@functools.partial(jax.jit, static_argnames=("num_news",))
def gnn_module_forward(entity_seq, entity_map, params, num_news):
    """entity_seq: [E, T, F] (batch_first like PyTorch); entity_map: [E, T]
    int32 with values in {0..num_news}, 0 = padding (news ids 1..num_news map
    to news node indices 0..num_news-1)."""
    E, T, F = entity_seq.shape

    # Fused gate weights (gate order r, z, n — matches PyTorch chunking).
    w_ih_cat = jnp.concatenate([params["w_ih"][k] for k in range(3)], axis=-1)
    w_hh_cat = jnp.concatenate([params["w_hh"][k] for k in range(3)], axis=-1)
    b_ih_cat = jnp.concatenate([params["b_ih"][k] for k in range(3)], axis=-1)
    b_hh_cat = jnp.concatenate([params["b_hh"][k] for k in range(3)], axis=-1)

    # Scaled one-hot assignment matrix for avg pooling, in TIME-MAJOR
    # flattening (index t*E + e) to match the kernel's concatenation order.
    flat_map = jnp.transpose(entity_map).reshape(-1)                   # [T*E]
    news_ids = jnp.arange(1, num_news + 1, dtype=entity_map.dtype)
    assign = (flat_map[None, :] == news_ids[:, None]).astype(jnp.float32)
    counts = assign.sum(axis=1, keepdims=True)                         # [N, 1]
    a_scaled = assign / jnp.maximum(counts, 1.0)                       # [N, T*E]
    mask = (counts > 0).astype(jnp.float32)                            # [N, 1]

    # Pad W2 to 128 output lanes so the final store is lane-dense.
    w2_pad = jnp.pad(params["mlp_w2"],
                     ((0, 0), (0, 128 - params["mlp_w2"].shape[1])))

    news_embedding, res_pad = fused_forward(
        entity_seq, w_ih_cat, w_hh_cat, b_ih_cat, b_hh_cat,
        a_scaled, mask, params["w_out"], params["b_out"],
        params["mlp_w1"], w2_pad)
    result = res_pad[:, :1]
    return result, news_embedding


# ----------------------------------------------------------------------------
# Pure-JAX reference (for self-check) — mirrors the PyTorch module tail:
# per-step GRU output projection, then avg pooling over assigned (e, t) pairs
# (empty news nodes -> zero vector), then the MLP.
# ----------------------------------------------------------------------------
def reference_forward(entity_seq, entity_map, params, num_news):
    E, T, F = entity_seq.shape
    H = params["w_hh"].shape[1]
    h = jnp.zeros((E, H), jnp.float32)
    outs = []
    for t in range(T):
        x = entity_seq[:, t, :]
        r = jax.nn.sigmoid(x @ params["w_ih"][0] + params["b_ih"][0]
                           + h @ params["w_hh"][0] + params["b_hh"][0])
        z = jax.nn.sigmoid(x @ params["w_ih"][1] + params["b_ih"][1]
                           + h @ params["w_hh"][1] + params["b_hh"][1])
        n = jnp.tanh(x @ params["w_ih"][2] + params["b_ih"][2]
                     + r * (h @ params["w_hh"][2] + params["b_hh"][2]))
        h = (1.0 - z) * n + z * h
        outs.append(h @ params["w_out"] + params["b_out"])
    entity_result = jnp.stack(outs, axis=1)                            # [E, T, F]

    flat_map = entity_map.reshape(-1)
    entity_flat = entity_result.reshape(E * T, F)
    news = []
    for nidx in range(num_news):
        msk = (flat_map == (nidx + 1)).astype(jnp.float32)
        cnt = msk.sum()
        s = (msk[:, None] * entity_flat).sum(axis=0)
        news.append(jnp.where(cnt > 0, s / jnp.maximum(cnt, 1.0), jnp.zeros((F,))))
    news_embedding = jnp.stack(news, axis=0)
    h1 = jax.nn.sigmoid(news_embedding @ params["mlp_w1"])
    result = h1 @ params["mlp_w2"]
    return result, news_embedding


if __name__ == "__main__":
    # Small synthetic shapes consistent with the module:
    #   feat_embed_size F = 32, GRU hidden = 2F = 64, entities E = 8,
    #   entity seq length T = 8, news nodes N = 4.
    F, E, T, N = 32, 8, 8, 4
    H = 2 * F

    key = jax.random.PRNGKey(0)
    ks = jax.random.split(key, 10)

    params = {
        # GRU weights stored as [3, in, H] in gate order (r, z, n),
        # i.e. the transpose of PyTorch's weight_ih_l0 / weight_hh_l0 chunks.
        "w_ih": 0.1 * jax.random.normal(ks[0], (3, F, H), jnp.float32),
        "w_hh": 0.1 * jax.random.normal(ks[1], (3, H, H), jnp.float32),
        "b_ih": 0.1 * jax.random.normal(ks[2], (3, 1, H), jnp.float32),
        "b_hh": 0.1 * jax.random.normal(ks[3], (3, 1, H), jnp.float32),
        # GRUModel.output_linear: [H, F] (W^T) + bias
        "w_out": 0.1 * jax.random.normal(ks[4], (H, F), jnp.float32),
        "b_out": 0.1 * jax.random.normal(ks[5], (1, F), jnp.float32),
        # MLP: linear1 [F, 2F] (no bias), linear2 [2F, 1] (no bias)
        "mlp_w1": 0.1 * jax.random.normal(ks[6], (F, 2 * F), jnp.float32),
        "mlp_w2": 0.1 * jax.random.normal(ks[7], (2 * F, 1), jnp.float32),
    }

    # Synthetic entity sequence (stands in for newsid2embed output of the
    # untranslated graph stage) and entity_map with padding zeros.
    entity_seq = jax.random.normal(ks[8], (E, T, F), jnp.float32)
    entity_map = jax.random.randint(ks[9], (E, T), 0, N + 1, dtype=jnp.int32)

    result, news_embedding = gnn_module_forward(entity_seq, entity_map, params, N)
    result = jax.block_until_ready(result)
    news_embedding = jax.block_until_ready(news_embedding)

    ref_result, ref_news = reference_forward(entity_seq, entity_map, params, N)
    assert result.shape == (N, 1) and news_embedding.shape == (N, F)
    np.testing.assert_allclose(np.asarray(result), np.asarray(ref_result),
                               rtol=1e-4, atol=1e-4)
    np.testing.assert_allclose(np.asarray(news_embedding), np.asarray(ref_news),
                               rtol=1e-4, atol=1e-4)
    print("KERNEL_OK")
</pallas_src>

<mosaic_0001>
module attributes {stable_mosaic.version = 11 : i64} {
  func.func @fused_gru_pool_mlp_kernel(%arg0: i32, %arg1: memref<8x8x32xf32, #tpu.memory_space<vmem>>, %arg2: memref<32x192xf32, #tpu.memory_space<vmem>>, %arg3: memref<64x192xf32, #tpu.memory_space<vmem>>, %arg4: memref<1x192xf32, #tpu.memory_space<vmem>>, %arg5: memref<1x192xf32, #tpu.memory_space<vmem>>, %arg6: memref<4x64xf32, #tpu.memory_space<vmem>>, %arg7: memref<4x1xf32, #tpu.memory_space<vmem>>, %arg8: memref<64x32xf32, #tpu.memory_space<vmem>>, %arg9: memref<1x32xf32, #tpu.memory_space<vmem>>, %arg10: memref<32x64xf32, #tpu.memory_space<vmem>>, %arg11: memref<64x128xf32, #tpu.memory_space<vmem>>, %arg12: memref<4x32xf32, #tpu.memory_space<vmem>>, %arg13: memref<4x128xf32, #tpu.memory_space<vmem>>) attributes {dimension_semantics = [#tpu.dimension_semantics<arbitrary>], iteration_bounds = array<i64: 1>, scalar_prefetch = 0 : i64, scratch_operands = 0 : i64, tpu.core_type = #tpu.core_type<tc>, window_params = [{pipeline_mode = #tpu.pipeline_mode<synchronous>, transform_indices = @transform_0, window_bounds = array<i64: 8, 8, 32>}, {pipeline_mode = #tpu.pipeline_mode<synchronous>, transform_indices = @transform_1, window_bounds = array<i64: 32, 192>}, {pipeline_mode = #tpu.pipeline_mode<synchronous>, transform_indices = @transform_2, window_bounds = array<i64: 64, 192>}, {pipeline_mode = #tpu.pipeline_mode<synchronous>, transform_indices = @transform_3, window_bounds = array<i64: 1, 192>}, {pipeline_mode = #tpu.pipeline_mode<synchronous>, transform_indices = @transform_4, window_bounds = array<i64: 1, 192>}, {pipeline_mode = #tpu.pipeline_mode<synchronous>, transform_indices = @transform_5, window_bounds = array<i64: 4, 64>}, {pipeline_mode = #tpu.pipeline_mode<synchronous>, transform_indices = @transform_6, window_bounds = array<i64: 4, 1>}, {pipeline_mode = #tpu.pipeline_mode<synchronous>, transform_indices = @transform_7, window_bounds = array<i64: 64, 32>}, {pipeline_mode = #tpu.pipeline_mode<synchronous>, transform_indices = @transform_8, window_bounds = array<i64: 1, 32>}, {pipeline_mode = #tpu.pipeline_mode<synchronous>, transform_indices = @transform_9, window_bounds = array<i64: 32, 64>}, {pipeline_mode = #tpu.pipeline_mode<synchronous>, transform_indices = @transform_10, window_bounds = array<i64: 64, 128>}, {pipeline_mode = #tpu.pipeline_mode<synchronous>, transform_indices = @transform_11, window_bounds = array<i64: 4, 32>}, {pipeline_mode = #tpu.pipeline_mode<synchronous>, transform_indices = @transform_12, window_bounds = array<i64: 4, 128>}]} {
    %c0 = arith.constant 0 : index
    %c0_0 = arith.constant 0 : index
    %c0_1 = arith.constant 0 : index
    %0 = vector.load %arg1[%c0, %c0_0, %c0_1] : memref<8x8x32xf32, #tpu.memory_space<vmem>>, vector<8x8x32xf32>
    %c0_2 = arith.constant 0 : index
    %c0_3 = arith.constant 0 : index
    %1 = vector.load %arg2[%c0_2, %c0_3] : memref<32x192xf32, #tpu.memory_space<vmem>>, vector<32x192xf32>
    %c0_4 = arith.constant 0 : index
    %c0_5 = arith.constant 0 : index
    %2 = vector.load %arg3[%c0_4, %c0_5] : memref<64x192xf32, #tpu.memory_space<vmem>>, vector<64x192xf32>
    %c0_6 = arith.constant 0 : index
    %c0_7 = arith.constant 0 : index
    %3 = vector.load %arg4[%c0_6, %c0_7] : memref<1x192xf32, #tpu.memory_space<vmem>>, vector<1x192xf32>
    %c0_8 = arith.constant 0 : index
    %c0_9 = arith.constant 0 : index
    %4 = vector.load %arg5[%c0_8, %c0_9] : memref<1x192xf32, #tpu.memory_space<vmem>>, vector<1x192xf32>
    %cst = arith.constant 0.000000e+00 : f32
    %5 = vector.broadcast %cst : f32 to vector<8x64xf32>
    %6 = vector.extract_strided_slice %0 {offsets = [0, 0, 0], sizes = [8, 1, 32], strides = [1, 1, 1]} : vector<8x8x32xf32> to vector<8x1x32xf32>
    %7 = vector.shape_cast %6 : vector<8x1x32xf32> to vector<8x32xf32>
    %cst_10 = arith.constant dense<0.000000e+00> : vector<8x192xf32>
    %8 = tpu.matmul %7, %1, %cst_10 {dimension_numbers = #tpu.dot_dimension_numbers<[1], [0], [0], [1], [0, 0, 1, 1], [], []>} : vector<8x32xf32>, vector<32x192xf32>, vector<8x192xf32> -> vector<8x192xf32>
    %9 = vector.broadcast %3 : vector<1x192xf32> to vector<8x192xf32>
    %10 = arith.addf %8, %9 : vector<8x192xf32>
    %cst_11 = arith.constant dense<0.000000e+00> : vector<8x192xf32>
    %11 = tpu.matmul %5, %2, %cst_11 {dimension_numbers = #tpu.dot_dimension_numbers<[1], [0], [0], [1], [0, 0, 1, 1], [], []>} : vector<8x64xf32>, vector<64x192xf32>, vector<8x192xf32> -> vector<8x192xf32>
    %12 = vector.broadcast %4 : vector<1x192xf32> to vector<8x192xf32>
    %13 = arith.addf %11, %12 : vector<8x192xf32>
    %14 = vector.extract_strided_slice %10 {offsets = [0, 0], sizes = [8, 64], strides = [1, 1]} : vector<8x192xf32> to vector<8x64xf32>
    %15 = vector.extract_strided_slice %13 {offsets = [0, 0], sizes = [8, 64], strides = [1, 1]} : vector<8x192xf32> to vector<8x64xf32>
    %16 = arith.addf %14, %15 : vector<8x64xf32>
    %17 = arith.negf %16 : vector<8x64xf32>
    %18 = math.exp %17 : vector<8x64xf32>
    %cst_12 = arith.constant 1.000000e+00 : f32
    %19 = vector.broadcast %cst_12 : f32 to vector<8x64xf32>
    %20 = arith.addf %19, %18 : vector<8x64xf32>
    %21 = arith.divf %19, %20 : vector<8x64xf32>
    %22 = vector.extract_strided_slice %10 {offsets = [0, 64], sizes = [8, 64], strides = [1, 1]} : vector<8x192xf32> to vector<8x64xf32>
    %23 = vector.extract_strided_slice %13 {offsets = [0, 64], sizes = [8, 64], strides = [1, 1]} : vector<8x192xf32> to vector<8x64xf32>
    %24 = arith.addf %22, %23 : vector<8x64xf32>
    %25 = arith.negf %24 : vector<8x64xf32>
    %26 = math.exp %25 : vector<8x64xf32>
    %cst_13 = arith.constant 1.000000e+00 : f32
    %27 = vector.broadcast %cst_13 : f32 to vector<8x64xf32>
    %28 = arith.addf %27, %26 : vector<8x64xf32>
    %29 = arith.divf %27, %28 : vector<8x64xf32>
    %30 = vector.extract_strided_slice %10 {offsets = [0, 128], sizes = [8, 64], strides = [1, 1]} : vector<8x192xf32> to vector<8x64xf32>
    %31 = vector.extract_strided_slice %13 {offsets = [0, 128], sizes = [8, 64], strides = [1, 1]} : vector<8x192xf32> to vector<8x64xf32>
    %32 = arith.mulf %21, %31 : vector<8x64xf32>
    %33 = arith.addf %30, %32 : vector<8x64xf32>
    %34 = math.tanh %33 : vector<8x64xf32>
    %cst_14 = arith.constant 1.000000e+00 : f32
    %35 = vector.broadcast %cst_14 : f32 to vector<8x64xf32>
    %36 = arith.subf %35, %29 : vector<8x64xf32>
    %37 = arith.mulf %36, %34 : vector<8x64xf32>
    %38 = arith.mulf %29, %5 : vector<8x64xf32>
    %39 = arith.addf %37, %38 : vector<8x64xf32>
    %40 = vector.extract_strided_slice %0 {offsets = [0, 1, 0], sizes = [8, 1, 32], strides = [1, 1, 1]} : vector<8x8x32xf32> to vector<8x1x32xf32>
    %41 = vector.shape_cast %40 : vector<8x1x32xf32> to vector<8x32xf32>
    %cst_15 = arith.constant dense<0.000000e+00> : vector<8x192xf32>
    %42 = tpu.matmul %41, %1, %cst_15 {dimension_numbers = #tpu.dot_dimension_numbers<[1], [0], [0], [1], [0, 0, 1, 1], [], []>} : vector<8x32xf32>, vector<32x192xf32>, vector<8x192xf32> -> vector<8x192xf32>
    %43 = vector.broadcast %3 : vector<1x192xf32> to vector<8x192xf32>
    %44 = arith.addf %42, %43 : vector<8x192xf32>
    %cst_16 = arith.constant dense<0.000000e+00> : vector<8x192xf32>
    %45 = tpu.matmul %39, %2, %cst_16 {dimension_numbers = #tpu.dot_dimension_numbers<[1], [0], [0], [1], [0, 0, 1, 1], [], []>} : vector<8x64xf32>, vector<64x192xf32>, vector<8x192xf32> -> vector<8x192xf32>
    %46 = vector.broadcast %4 : vector<1x192xf32> to vector<8x192xf32>
    %47 = arith.addf %45, %46 : vector<8x192xf32>
    %48 = vector.extract_strided_slice %44 {offsets = [0, 0], sizes = [8, 64], strides = [1, 1]} : vector<8x192xf32> to vector<8x64xf32>
    %49 = vector.extract_strided_slice %47 {offsets = [0, 0], sizes = [8, 64], strides = [1, 1]} : vector<8x192xf32> to vector<8x64xf32>
    %50 = arith.addf %48, %49 : vector<8x64xf32>
    %51 = arith.negf %50 : vector<8x64xf32>
    %52 = math.exp %51 : vector<8x64xf32>
    %cst_17 = arith.constant 1.000000e+00 : f32
    %53 = vector.broadcast %cst_17 : f32 to vector<8x64xf32>
    %54 = arith.addf %53, %52 : vector<8x64xf32>
    %55 = arith.divf %53, %54 : vector<8x64xf32>
    %56 = vector.extract_strided_slice %44 {offsets = [0, 64], sizes = [8, 64], strides = [1, 1]} : vector<8x192xf32> to vector<8x64xf32>
    %57 = vector.extract_strided_slice %47 {offsets = [0, 64], sizes = [8, 64], strides = [1, 1]} : vector<8x192xf32> to vector<8x64xf32>
    %58 = arith.addf %56, %57 : vector<8x64xf32>
    %59 = arith.negf %58 : vector<8x64xf32>
    %60 = math.exp %59 : vector<8x64xf32>
    %cst_18 = arith.constant 1.000000e+00 : f32
    %61 = vector.broadcast %cst_18 : f32 to vector<8x64xf32>
    %62 = arith.addf %61, %60 : vector<8x64xf32>
    %63 = arith.divf %61, %62 : vector<8x64xf32>
    %64 = vector.extract_strided_slice %44 {offsets = [0, 128], sizes = [8, 64], strides = [1, 1]} : vector<8x192xf32> to vector<8x64xf32>
    %65 = vector.extract_strided_slice %47 {offsets = [0, 128], sizes = [8, 64], strides = [1, 1]} : vector<8x192xf32> to vector<8x64xf32>
    %66 = arith.mulf %55, %65 : vector<8x64xf32>
    %67 = arith.addf %64, %66 : vector<8x64xf32>
    %68 = math.tanh %67 : vector<8x64xf32>
    %cst_19 = arith.constant 1.000000e+00 : f32
    %69 = vector.broadcast %cst_19 : f32 to vector<8x64xf32>
    %70 = arith.subf %69, %63 : vector<8x64xf32>
    %71 = arith.mulf %70, %68 : vector<8x64xf32>
    %72 = arith.mulf %63, %39 : vector<8x64xf32>
    %73 = arith.addf %71, %72 : vector<8x64xf32>
    %74 = vector.extract_strided_slice %0 {offsets = [0, 2, 0], sizes = [8, 1, 32], strides = [1, 1, 1]} : vector<8x8x32xf32> to vector<8x1x32xf32>
    %75 = vector.shape_cast %74 : vector<8x1x32xf32> to vector<8x32xf32>
    %cst_20 = arith.constant dense<0.000000e+00> : vector<8x192xf32>
    %76 = tpu.matmul %75, %1, %cst_20 {dimension_numbers = #tpu.dot_dimension_numbers<[1], [0], [0], [1], [0, 0, 1, 1], [], []>} : vector<8x32xf32>, vector<32x192xf32>, vector<8x192xf32> -> vector<8x192xf32>
    %77 = vector.broadcast %3 : vector<1x192xf32> to vector<8x192xf32>
    %78 = arith.addf %76, %77 : vector<8x192xf32>
    %cst_21 = arith.constant dense<0.000000e+00> : vector<8x192xf32>
    %79 = tpu.matmul %73, %2, %cst_21 {dimension_numbers = #tpu.dot_dimension_numbers<[1], [0], [0], [1], [0, 0, 1, 1], [], []>} : vector<8x64xf32>, vector<64x192xf32>, vector<8x192xf32> -> vector<8x192xf32>
    %80 = vector.broadcast %4 : vector<1x192xf32> to vector<8x192xf32>
    %81 = arith.addf %79, %80 : vector<8x192xf32>
    %82 = vector.extract_strided_slice %78 {offsets = [0, 0], sizes = [8, 64], strides = [1, 1]} : vector<8x192xf32> to vector<8x64xf32>
    %83 = vector.extract_strided_slice %81 {offsets = [0, 0], sizes = [8, 64], strides = [1, 1]} : vector<8x192xf32> to vector<8x64xf32>
    %84 = arith.addf %82, %83 : vector<8x64xf32>
    %85 = arith.negf %84 : vector<8x64xf32>
    %86 = math.exp %85 : vector<8x64xf32>
    %cst_22 = arith.constant 1.000000e+00 : f32
    %87 = vector.broadcast %cst_22 : f32 to vector<8x64xf32>
    %88 = arith.addf %87, %86 : vector<8x64xf32>
    %89 = arith.divf %87, %88 : vector<8x64xf32>
    %90 = vector.extract_strided_slice %78 {offsets = [0, 64], sizes = [8, 64], strides = [1, 1]} : vector<8x192xf32> to vector<8x64xf32>
    %91 = vector.extract_strided_slice %81 {offsets = [0, 64], sizes = [8, 64], strides = [1, 1]} : vector<8x192xf32> to vector<8x64xf32>
    %92 = arith.addf %90, %91 : vector<8x64xf32>
    %93 = arith.negf %92 : vector<8x64xf32>
    %94 = math.exp %93 : vector<8x64xf32>
    %cst_23 = arith.constant 1.000000e+00 : f32
    %95 = vector.broadcast %cst_23 : f32 to vector<8x64xf32>
    %96 = arith.addf %95, %94 : vector<8x64xf32>
    %97 = arith.divf %95, %96 : vector<8x64xf32>
    %98 = vector.extract_strided_slice %78 {offsets = [0, 128], sizes = [8, 64], strides = [1, 1]} : vector<8x192xf32> to vector<8x64xf32>
    %99 = vector.extract_strided_slice %81 {offsets = [0, 128], sizes = [8, 64], strides = [1, 1]} : vector<8x192xf32> to vector<8x64xf32>
    %100 = arith.mulf %89, %99 : vector<8x64xf32>
    %101 = arith.addf %98, %100 : vector<8x64xf32>
    %102 = math.tanh %101 : vector<8x64xf32>
    %cst_24 = arith.constant 1.000000e+00 : f32
    %103 = vector.broadcast %cst_24 : f32 to vector<8x64xf32>
    %104 = arith.subf %103, %97 : vector<8x64xf32>
    %105 = arith.mulf %104, %102 : vector<8x64xf32>
    %106 = arith.mulf %97, %73 : vector<8x64xf32>
    %107 = arith.addf %105, %106 : vector<8x64xf32>
    %108 = vector.extract_strided_slice %0 {offsets = [0, 3, 0], sizes = [8, 1, 32], strides = [1, 1, 1]} : vector<8x8x32xf32> to vector<8x1x32xf32>
    %109 = vector.shape_cast %108 : vector<8x1x32xf32> to vector<8x32xf32>
    %cst_25 = arith.constant dense<0.000000e+00> : vector<8x192xf32>
    %110 = tpu.matmul %109, %1, %cst_25 {dimension_numbers = #tpu.dot_dimension_numbers<[1], [0], [0], [1], [0, 0, 1, 1], [], []>} : vector<8x32xf32>, vector<32x192xf32>, vector<8x192xf32> -> vector<8x192xf32>
    %111 = vector.broadcast %3 : vector<1x192xf32> to vector<8x192xf32>
    %112 = arith.addf %110, %111 : vector<8x192xf32>
    %cst_26 = arith.constant dense<0.000000e+00> : vector<8x192xf32>
    %113 = tpu.matmul %107, %2, %cst_26 {dimension_numbers = #tpu.dot_dimension_numbers<[1], [0], [0], [1], [0, 0, 1, 1], [], []>} : vector<8x64xf32>, vector<64x192xf32>, vector<8x192xf32> -> vector<8x192xf32>
    %114 = vector.broadcast %4 : vector<1x192xf32> to vector<8x192xf32>
    %115 = arith.addf %113, %114 : vector<8x192xf32>
    %116 = vector.extract_strided_slice %112 {offsets = [0, 0], sizes = [8, 64], strides = [1, 1]} : vector<8x192xf32> to vector<8x64xf32>
    %117 = vector.extract_strided_slice %115 {offsets = [0, 0], sizes = [8, 64], strides = [1, 1]} : vector<8x192xf32> to vector<8x64xf32>
    %118 = arith.addf %116, %117 : vector<8x64xf32>
    %119 = arith.negf %118 : vector<8x64xf32>
    %120 = math.exp %119 : vector<8x64xf32>
    %cst_27 = arith.constant 1.000000e+00 : f32
    %121 = vector.broadcast %cst_27 : f32 to vector<8x64xf32>
    %122 = arith.addf %121, %120 : vector<8x64xf32>
    %123 = arith.divf %121, %122 : vector<8x64xf32>
    %124 = vector.extract_strided_slice %112 {offsets = [0, 64], sizes = [8, 64], strides = [1, 1]} : vector<8x192xf32> to vector<8x64xf32>
    %125 = vector.extract_strided_slice %115 {offsets = [0, 64], sizes = [8, 64], strides = [1, 1]} : vector<8x192xf32> to vector<8x64xf32>
    %126 = arith.addf %124, %125 : vector<8x64xf32>
    %127 = arith.negf %126 : vector<8x64xf32>
    %128 = math.exp %127 : vector<8x64xf32>
    %cst_28 = arith.constant 1.000000e+00 : f32
    %129 = vector.broadcast %cst_28 : f32 to vector<8x64xf32>
    %130 = arith.addf %129, %128 : vector<8x64xf32>
    %131 = arith.divf %129, %130 : vector<8x64xf32>
    %132 = vector.extract_strided_slice %112 {offsets = [0, 128], sizes = [8, 64], strides = [1, 1]} : vector<8x192xf32> to vector<8x64xf32>
    %133 = vector.extract_strided_slice %115 {offsets = [0, 128], sizes = [8, 64], strides = [1, 1]} : vector<8x192xf32> to vector<8x64xf32>
    %134 = arith.mulf %123, %133 : vector<8x64xf32>
    %135 = arith.addf %132, %134 : vector<8x64xf32>
    %136 = math.tanh %135 : vector<8x64xf32>
    %cst_29 = arith.constant 1.000000e+00 : f32
    %137 = vector.broadcast %cst_29 : f32 to vector<8x64xf32>
    %138 = arith.subf %137, %131 : vector<8x64xf32>
    %139 = arith.mulf %138, %136 : vector<8x64xf32>
    %140 = arith.mulf %131, %107 : vector<8x64xf32>
    %141 = arith.addf %139, %140 : vector<8x64xf32>
    %142 = vector.extract_strided_slice %0 {offsets = [0, 4, 0], sizes = [8, 1, 32], strides = [1, 1, 1]} : vector<8x8x32xf32> to vector<8x1x32xf32>
    %143 = vector.shape_cast %142 : vector<8x1x32xf32> to vector<8x32xf32>
    %cst_30 = arith.constant dense<0.000000e+00> : vector<8x192xf32>
    %144 = tpu.matmul %143, %1, %cst_30 {dimension_numbers = #tpu.dot_dimension_numbers<[1], [0], [0], [1], [0, 0, 1, 1], [], []>} : vector<8x32xf32>, vector<32x192xf32>, vector<8x192xf32> -> vector<8x192xf32>
    %145 = vector.broadcast %3 : vector<1x192xf32> to vector<8x192xf32>
    %146 = arith.addf %144, %145 : vector<8x192xf32>
    %cst_31 = arith.constant dense<0.000000e+00> : vector<8x192xf32>
    %147 = tpu.matmul %141, %2, %cst_31 {dimension_numbers = #tpu.dot_dimension_numbers<[1], [0], [0], [1], [0, 0, 1, 1], [], []>} : vector<8x64xf32>, vector<64x192xf32>, vector<8x192xf32> -> vector<8x192xf32>
    %148 = vector.broadcast %4 : vector<1x192xf32> to vector<8x192xf32>
    %149 = arith.addf %147, %148 : vector<8x192xf32>
    %150 = vector.extract_strided_slice %146 {offsets = [0, 0], sizes = [8, 64], strides = [1, 1]} : vector<8x192xf32> to vector<8x64xf32>
    %151 = vector.extract_strided_slice %149 {offsets = [0, 0], sizes = [8, 64], strides = [1, 1]} : vector<8x192xf32> to vector<8x64xf32>
    %152 = arith.addf %150, %151 : vector<8x64xf32>
    %153 = arith.negf %152 : vector<8x64xf32>
    %154 = math.exp %153 : vector<8x64xf32>
    %cst_32 = arith.constant 1.000000e+00 : f32
    %155 = vector.broadcast %cst_32 : f32 to vector<8x64xf32>
    %156 = arith.addf %155, %154 : vector<8x64xf32>
    %157 = arith.divf %155, %156 : vector<8x64xf32>
    %158 = vector.extract_strided_slice %146 {offsets = [0, 64], sizes = [8, 64], strides = [1, 1]} : vector<8x192xf32> to vector<8x64xf32>
    %159 = vector.extract_strided_slice %149 {offsets = [0, 64], sizes = [8, 64], strides = [1, 1]} : vector<8x192xf32> to vector<8x64xf32>
    %160 = arith.addf %158, %159 : vector<8x64xf32>
    %161 = arith.negf %160 : vector<8x64xf32>
    %162 = math.exp %161 : vector<8x64xf32>
    %cst_33 = arith.constant 1.000000e+00 : f32
    %163 = vector.broadcast %cst_33 : f32 to vector<8x64xf32>
    %164 = arith.addf %163, %162 : vector<8x64xf32>
    %165 = arith.divf %163, %164 : vector<8x64xf32>
    %166 = vector.extract_strided_slice %146 {offsets = [0, 128], sizes = [8, 64], strides = [1, 1]} : vector<8x192xf32> to vector<8x64xf32>
    %167 = vector.extract_strided_slice %149 {offsets = [0, 128], sizes = [8, 64], strides = [1, 1]} : vector<8x192xf32> to vector<8x64xf32>
    %168 = arith.mulf %157, %167 : vector<8x64xf32>
    %169 = arith.addf %166, %168 : vector<8x64xf32>
    %170 = math.tanh %169 : vector<8x64xf32>
    %cst_34 = arith.constant 1.000000e+00 : f32
    %171 = vector.broadcast %cst_34 : f32 to vector<8x64xf32>
    %172 = arith.subf %171, %165 : vector<8x64xf32>
    %173 = arith.mulf %172, %170 : vector<8x64xf32>
    %174 = arith.mulf %165, %141 : vector<8x64xf32>
    %175 = arith.addf %173, %174 : vector<8x64xf32>
    %176 = vector.extract_strided_slice %0 {offsets = [0, 5, 0], sizes = [8, 1, 32], strides = [1, 1, 1]} : vector<8x8x32xf32> to vector<8x1x32xf32>
    %177 = vector.shape_cast %176 : vector<8x1x32xf32> to vector<8x32xf32>
    %cst_35 = arith.constant dense<0.000000e+00> : vector<8x192xf32>
    %178 = tpu.matmul %177, %1, %cst_35 {dimension_numbers = #tpu.dot_dimension_numbers<[1], [0], [0], [1], [0, 0, 1, 1], [], []>} : vector<8x32xf32>, vector<32x192xf32>, vector<8x192xf32> -> vector<8x192xf32>
    %179 = vector.broadcast %3 : vector<1x192xf32> to vector<8x192xf32>
    %180 = arith.addf %178, %179 : vector<8x192xf32>
    %cst_36 = arith.constant dense<0.000000e+00> : vector<8x192xf32>
    %181 = tpu.matmul %175, %2, %cst_36 {dimension_numbers = #tpu.dot_dimension_numbers<[1], [0], [0], [1], [0, 0, 1, 1], [], []>} : vector<8x64xf32>, vector<64x192xf32>, vector<8x192xf32> -> vector<8x192xf32>
    %182 = vector.broadcast %4 : vector<1x192xf32> to vector<8x192xf32>
    %183 = arith.addf %181, %182 : vector<8x192xf32>
    %184 = vector.extract_strided_slice %180 {offsets = [0, 0], sizes = [8, 64], strides = [1, 1]} : vector<8x192xf32> to vector<8x64xf32>
    %185 = vector.extract_strided_slice %183 {offsets = [0, 0], sizes = [8, 64], strides = [1, 1]} : vector<8x192xf32> to vector<8x64xf32>
    %186 = arith.addf %184, %185 : vector<8x64xf32>
    %187 = arith.negf %186 : vector<8x64xf32>
    %188 = math.exp %187 : vector<8x64xf32>
    %cst_37 = arith.constant 1.000000e+00 : f32
    %189 = vector.broadcast %cst_37 : f32 to vector<8x64xf32>
    %190 = arith.addf %189, %188 : vector<8x64xf32>
    %191 = arith.divf %189, %190 : vector<8x64xf32>
    %192 = vector.extract_strided_slice %180 {offsets = [0, 64], sizes = [8, 64], strides = [1, 1]} : vector<8x192xf32> to vector<8x64xf32>
    %193 = vector.extract_strided_slice %183 {offsets = [0, 64], sizes = [8, 64], strides = [1, 1]} : vector<8x192xf32> to vector<8x64xf32>
    %194 = arith.addf %192, %193 : vector<8x64xf32>
    %195 = arith.negf %194 : vector<8x64xf32>
    %196 = math.exp %195 : vector<8x64xf32>
    %cst_38 = arith.constant 1.000000e+00 : f32
    %197 = vector.broadcast %cst_38 : f32 to vector<8x64xf32>
    %198 = arith.addf %197, %196 : vector<8x64xf32>
    %199 = arith.divf %197, %198 : vector<8x64xf32>
    %200 = vector.extract_strided_slice %180 {offsets = [0, 128], sizes = [8, 64], strides = [1, 1]} : vector<8x192xf32> to vector<8x64xf32>
    %201 = vector.extract_strided_slice %183 {offsets = [0, 128], sizes = [8, 64], strides = [1, 1]} : vector<8x192xf32> to vector<8x64xf32>
    %202 = arith.mulf %191, %201 : vector<8x64xf32>
    %203 = arith.addf %200, %202 : vector<8x64xf32>
    %204 = math.tanh %203 : vector<8x64xf32>
    %cst_39 = arith.constant 1.000000e+00 : f32
    %205 = vector.broadcast %cst_39 : f32 to vector<8x64xf32>
    %206 = arith.subf %205, %199 : vector<8x64xf32>
    %207 = arith.mulf %206, %204 : vector<8x64xf32>
    %208 = arith.mulf %199, %175 : vector<8x64xf32>
    %209 = arith.addf %207, %208 : vector<8x64xf32>
    %210 = vector.extract_strided_slice %0 {offsets = [0, 6, 0], sizes = [8, 1, 32], strides = [1, 1, 1]} : vector<8x8x32xf32> to vector<8x1x32xf32>
    %211 = vector.shape_cast %210 : vector<8x1x32xf32> to vector<8x32xf32>
    %cst_40 = arith.constant dense<0.000000e+00> : vector<8x192xf32>
    %212 = tpu.matmul %211, %1, %cst_40 {dimension_numbers = #tpu.dot_dimension_numbers<[1], [0], [0], [1], [0, 0, 1, 1], [], []>} : vector<8x32xf32>, vector<32x192xf32>, vector<8x192xf32> -> vector<8x192xf32>
    %213 = vector.broadcast %3 : vector<1x192xf32> to vector<8x192xf32>
    %214 = arith.addf %212, %213 : vector<8x192xf32>
    %cst_41 = arith.constant dense<0.000000e+00> : vector<8x192xf32>
    %215 = tpu.matmul %209, %2, %cst_41 {dimension_numbers = #tpu.dot_dimension_numbers<[1], [0], [0], [1], [0, 0, 1, 1], [], []>} : vector<8x64xf32>, vector<64x192xf32>, vector<8x192xf32> -> vector<8x192xf32>
    %216 = vector.broadcast %4 : vector<1x192xf32> to vector<8x192xf32>
    %217 = arith.addf %215, %216 : vector<8x192xf32>
    %218 = vector.extract_strided_slice %214 {offsets = [0, 0], sizes = [8, 64], strides = [1, 1]} : vector<8x192xf32> to vector<8x64xf32>
    %219 = vector.extract_strided_slice %217 {offsets = [0, 0], sizes = [8, 64], strides = [1, 1]} : vector<8x192xf32> to vector<8x64xf32>
    %220 = arith.addf %218, %219 : vector<8x64xf32>
    %221 = arith.negf %220 : vector<8x64xf32>
    %222 = math.exp %221 : vector<8x64xf32>
    %cst_42 = arith.constant 1.000000e+00 : f32
    %223 = vector.broadcast %cst_42 : f32 to vector<8x64xf32>
    %224 = arith.addf %223, %222 : vector<8x64xf32>
    %225 = arith.divf %223, %224 : vector<8x64xf32>
    %226 = vector.extract_strided_slice %214 {offsets = [0, 64], sizes = [8, 64], strides = [1, 1]} : vector<8x192xf32> to vector<8x64xf32>
    %227 = vector.extract_strided_slice %217 {offsets = [0, 64], sizes = [8, 64], strides = [1, 1]} : vector<8x192xf32> to vector<8x64xf32>
    %228 = arith.addf %226, %227 : vector<8x64xf32>
    %229 = arith.negf %228 : vector<8x64xf32>
    %230 = math.exp %229 : vector<8x64xf32>
    %cst_43 = arith.constant 1.000000e+00 : f32
    %231 = vector.broadcast %cst_43 : f32 to vector<8x64xf32>
    %232 = arith.addf %231, %230 : vector<8x64xf32>
    %233 = arith.divf %231, %232 : vector<8x64xf32>
    %234 = vector.extract_strided_slice %214 {offsets = [0, 128], sizes = [8, 64], strides = [1, 1]} : vector<8x192xf32> to vector<8x64xf32>
    %235 = vector.extract_strided_slice %217 {offsets = [0, 128], sizes = [8, 64], strides = [1, 1]} : vector<8x192xf32> to vector<8x64xf32>
    %236 = arith.mulf %225, %235 : vector<8x64xf32>
    %237 = arith.addf %234, %236 : vector<8x64xf32>
    %238 = math.tanh %237 : vector<8x64xf32>
    %cst_44 = arith.constant 1.000000e+00 : f32
    %239 = vector.broadcast %cst_44 : f32 to vector<8x64xf32>
    %240 = arith.subf %239, %233 : vector<8x64xf32>
    %241 = arith.mulf %240, %238 : vector<8x64xf32>
    %242 = arith.mulf %233, %209 : vector<8x64xf32>
    %243 = arith.addf %241, %242 : vector<8x64xf32>
    %244 = vector.extract_strided_slice %0 {offsets = [0, 7, 0], sizes = [8, 1, 32], strides = [1, 1, 1]} : vector<8x8x32xf32> to vector<8x1x32xf32>
    %245 = vector.shape_cast %244 : vector<8x1x32xf32> to vector<8x32xf32>
    %cst_45 = arith.constant dense<0.000000e+00> : vector<8x192xf32>
    %246 = tpu.matmul %245, %1, %cst_45 {dimension_numbers = #tpu.dot_dimension_numbers<[1], [0], [0], [1], [0, 0, 1, 1], [], []>} : vector<8x32xf32>, vector<32x192xf32>, vector<8x192xf32> -> vector<8x192xf32>
    %247 = vector.broadcast %3 : vector<1x192xf32> to vector<8x192xf32>
    %248 = arith.addf %246, %247 : vector<8x192xf32>
    %cst_46 = arith.constant dense<0.000000e+00> : vector<8x192xf32>
    %249 = tpu.matmul %243, %2, %cst_46 {dimension_numbers = #tpu.dot_dimension_numbers<[1], [0], [0], [1], [0, 0, 1, 1], [], []>} : vector<8x64xf32>, vector<64x192xf32>, vector<8x192xf32> -> vector<8x192xf32>
    %250 = vector.broadcast %4 : vector<1x192xf32> to vector<8x192xf32>
    %251 = arith.addf %249, %250 : vector<8x192xf32>
    %252 = vector.extract_strided_slice %248 {offsets = [0, 0], sizes = [8, 64], strides = [1, 1]} : vector<8x192xf32> to vector<8x64xf32>
    %253 = vector.extract_strided_slice %251 {offsets = [0, 0], sizes = [8, 64], strides = [1, 1]} : vector<8x192xf32> to vector<8x64xf32>
    %254 = arith.addf %252, %253 : vector<8x64xf32>
    %255 = arith.negf %254 : vector<8x64xf32>
    %256 = math.exp %255 : vector<8x64xf32>
    %cst_47 = arith.constant 1.000000e+00 : f32
    %257 = vector.broadcast %cst_47 : f32 to vector<8x64xf32>
    %258 = arith.addf %257, %256 : vector<8x64xf32>
    %259 = arith.divf %257, %258 : vector<8x64xf32>
    %260 = vector.extract_strided_slice %248 {offsets = [0, 64], sizes = [8, 64], strides = [1, 1]} : vector<8x192xf32> to vector<8x64xf32>
    %261 = vector.extract_strided_slice %251 {offsets = [0, 64], sizes = [8, 64], strides = [1, 1]} : vector<8x192xf32> to vector<8x64xf32>
    %262 = arith.addf %260, %261 : vector<8x64xf32>
    %263 = arith.negf %262 : vector<8x64xf32>
    %264 = math.exp %263 : vector<8x64xf32>
    %cst_48 = arith.constant 1.000000e+00 : f32
    %265 = vector.broadcast %cst_48 : f32 to vector<8x64xf32>
    %266 = arith.addf %265, %264 : vector<8x64xf32>
    %267 = arith.divf %265, %266 : vector<8x64xf32>
    %268 = vector.extract_strided_slice %248 {offsets = [0, 128], sizes = [8, 64], strides = [1, 1]} : vector<8x192xf32> to vector<8x64xf32>
    %269 = vector.extract_strided_slice %251 {offsets = [0, 128], sizes = [8, 64], strides = [1, 1]} : vector<8x192xf32> to vector<8x64xf32>
    %270 = arith.mulf %259, %269 : vector<8x64xf32>
    %271 = arith.addf %268, %270 : vector<8x64xf32>
    %272 = math.tanh %271 : vector<8x64xf32>
    %cst_49 = arith.constant 1.000000e+00 : f32
    %273 = vector.broadcast %cst_49 : f32 to vector<8x64xf32>
    %274 = arith.subf %273, %267 : vector<8x64xf32>
    %275 = arith.mulf %274, %272 : vector<8x64xf32>
    %276 = arith.mulf %267, %243 : vector<8x64xf32>
    %277 = arith.addf %275, %276 : vector<8x64xf32>
    %278 = tpu.concatenate %39, %73, %107, %141, %175, %209, %243, %277 in 0 : vector<8x64xf32>, vector<8x64xf32>, vector<8x64xf32>, vector<8x64xf32>, vector<8x64xf32>, vector<8x64xf32>, vector<8x64xf32>, vector<8x64xf32> -> vector<64x64xf32>
    %c0_50 = arith.constant 0 : index
    %c0_51 = arith.constant 0 : index
    %279 = vector.load %arg6[%c0_50, %c0_51] : memref<4x64xf32, #tpu.memory_space<vmem>>, vector<4x64xf32>
    %cst_52 = arith.constant dense<0.000000e+00> : vector<4x64xf32>
    %280 = tpu.matmul %279, %278, %cst_52 {dimension_numbers = #tpu.dot_dimension_numbers<[1], [0], [0], [1], [0, 0, 1, 1], [], []>} : vector<4x64xf32>, vector<64x64xf32>, vector<4x64xf32> -> vector<4x64xf32>
    %c0_53 = arith.constant 0 : index
    %c0_54 = arith.constant 0 : index
    %281 = vector.load %arg8[%c0_53, %c0_54] : memref<64x32xf32, #tpu.memory_space<vmem>>, vector<64x32xf32>
    %cst_55 = arith.constant dense<0.000000e+00> : vector<4x32xf32>
    %282 = tpu.matmul %280, %281, %cst_55 {dimension_numbers = #tpu.dot_dimension_numbers<[1], [0], [0], [1], [0, 0, 1, 1], [], []>} : vector<4x64xf32>, vector<64x32xf32>, vector<4x32xf32> -> vector<4x32xf32>
    %c0_56 = arith.constant 0 : index
    %c0_57 = arith.constant 0 : index
    %283 = vector.load %arg9[%c0_56, %c0_57] : memref<1x32xf32, #tpu.memory_space<vmem>>, vector<1x32xf32>
    %284 = vector.broadcast %283 : vector<1x32xf32> to vector<4x32xf32>
    %285 = arith.addf %282, %284 : vector<4x32xf32>
    %c0_58 = arith.constant 0 : index
    %c0_59 = arith.constant 0 : index
    %286 = vector.load %arg7[%c0_58, %c0_59] : memref<4x1xf32, #tpu.memory_space<vmem>>, vector<4x1xf32>
    %287 = vector.broadcast %286 : vector<4x1xf32> to vector<4x32xf32>
    %288 = arith.mulf %285, %287 : vector<4x32xf32>
    %c0_60 = arith.constant 0 : index
    %c0_61 = arith.constant 0 : index
    %289 = vector.load %arg12[%c0_60, %c0_61] : memref<4x32xf32, #tpu.memory_space<vmem>>, vector<4x32xf32>
    tpu.vector_store %arg12[%c0_60, %c0_61], %288 {strides = array<i32>} : memref<4x32xf32, #tpu.memory_space<vmem>>, vector<4x32xf32>,
    %c0_62 = arith.constant 0 : index
    %c0_63 = arith.constant 0 : index
    %290 = vector.load %arg10[%c0_62, %c0_63] : memref<32x64xf32, #tpu.memory_space<vmem>>, vector<32x64xf32>
    %cst_64 = arith.constant dense<0.000000e+00> : vector<4x64xf32>
    %291 = tpu.matmul %288, %290, %cst_64 {dimension_numbers = #tpu.dot_dimension_numbers<[1], [0], [0], [1], [0, 0, 1, 1], [], []>} : vector<4x32xf32>, vector<32x64xf32>, vector<4x64xf32> -> vector<4x64xf32>
    %292 = arith.negf %291 : vector<4x64xf32>
    %293 = math.exp %292 : vector<4x64xf32>
    %cst_65 = arith.constant 1.000000e+00 : f32
    %294 = vector.broadcast %cst_65 : f32 to vector<4x64xf32>
    %295 = arith.addf %294, %293 : vector<4x64xf32>
    %296 = arith.divf %294, %295 : vector<4x64xf32>
    %c0_66 = arith.constant 0 : index
    %c0_67 = arith.constant 0 : index
    %297 = vector.load %arg11[%c0_66, %c0_67] : memref<64x128xf32, #tpu.memory_space<vmem>>, vector<64x128xf32>
    %cst_68 = arith.constant dense<0.000000e+00> : vector<4x128xf32>
    %298 = tpu.matmul %296, %297, %cst_68 {dimension_numbers = #tpu.dot_dimension_numbers<[1], [0], [0], [1], [0, 0, 1, 1], [], []>} : vector<4x64xf32>, vector<64x128xf32>, vector<4x128xf32> -> vector<4x128xf32>
    %c0_69 = arith.constant 0 : index
    %c0_70 = arith.constant 0 : index
    %299 = vector.load %arg13[%c0_69, %c0_70] : memref<4x128xf32, #tpu.memory_space<vmem>>, vector<4x128xf32>
    tpu.vector_store %arg13[%c0_69, %c0_70], %298 {strides = array<i32>} : memref<4x128xf32, #tpu.memory_space<vmem>>, vector<4x128xf32>,
    return
  }
  func.func @transform_0(%arg0: i32) -> (i32, i32, i32) {
    %c0_i32 = arith.constant 0 : i32
    %c0_i32_0 = arith.constant 0 : i32
    %c0_i32_1 = arith.constant 0 : i32
    %c0_i32_2 = arith.constant 0 : i32
    return %c0_i32, %c0_i32_0, %c0_i32_1 : i32, i32, i32
  }
  func.func @transform_1(%arg0: i32) -> (i32, i32) {
    %c0_i32 = arith.constant 0 : i32
    %c0_i32_0 = arith.constant 0 : i32
    %c0_i32_1 = arith.constant 0 : i32
    return %c0_i32, %c0_i32_0 : i32, i32
  }
  func.func @transform_2(%arg0: i32) -> (i32, i32) {
    %c0_i32 = arith.constant 0 : i32
    %c0_i32_0 = arith.constant 0 : i32
    %c0_i32_1 = arith.constant 0 : i32
    return %c0_i32, %c0_i32_0 : i32, i32
  }
  func.func @transform_3(%arg0: i32) -> (i32, i32) {
    %c0_i32 = arith.constant 0 : i32
    %c0_i32_0 = arith.constant 0 : i32
    %c0_i32_1 = arith.constant 0 : i32
    return %c0_i32, %c0_i32_0 : i32, i32
  }
  func.func @transform_4(%arg0: i32) -> (i32, i32) {
    %c0_i32 = arith.constant 0 : i32
    %c0_i32_0 = arith.constant 0 : i32
    %c0_i32_1 = arith.constant 0 : i32
    return %c0_i32, %c0_i32_0 : i32, i32
  }
  func.func @transform_5(%arg0: i32) -> (i32, i32) {
    %c0_i32 = arith.constant 0 : i32
    %c0_i32_0 = arith.constant 0 : i32
    %c0_i32_1 = arith.constant 0 : i32
    return %c0_i32, %c0_i32_0 : i32, i32
  }
  func.func @transform_6(%arg0: i32) -> (i32, i32) {
    %c0_i32 = arith.constant 0 : i32
    %c0_i32_0 = arith.constant 0 : i32
    %c0_i32_1 = arith.constant 0 : i32
    return %c0_i32, %c0_i32_0 : i32, i32
  }
  func.func @transform_7(%arg0: i32) -> (i32, i32) {
    %c0_i32 = arith.constant 0 : i32
    %c0_i32_0 = arith.constant 0 : i32
    %c0_i32_1 = arith.constant 0 : i32
    return %c0_i32, %c0_i32_0 : i32, i32
  }
  func.func @transform_8(%arg0: i32) -> (i32, i32) {
    %c0_i32 = arith.constant 0 : i32
    %c0_i32_0 = arith.constant 0 : i32
    %c0_i32_1 = arith.constant 0 : i32
    return %c0_i32, %c0_i32_0 : i32, i32
  }
  func.func @transform_9(%arg0: i32) -> (i32, i32) {
    %c0_i32 = arith.constant 0 : i32
    %c0_i32_0 = arith.constant 0 : i32
    %c0_i32_1 = arith.constant 0 : i32
    return %c0_i32, %c0_i32_0 : i32, i32
  }
  func.func @transform_10(%arg0: i32) -> (i32, i32) {
    %c0_i32 = arith.constant 0 : i32
    %c0_i32_0 = arith.constant 0 : i32
    %c0_i32_1 = arith.constant 0 : i32
    return %c0_i32, %c0_i32_0 : i32, i32
  }
  func.func @transform_11(%arg0: i32) -> (i32, i32) {
    %c0_i32 = arith.constant 0 : i32
    %c0_i32_0 = arith.constant 0 : i32
    %c0_i32_1 = arith.constant 0 : i32
    return %c0_i32, %c0_i32_0 : i32, i32
  }
  func.func @transform_12(%arg0: i32) -> (i32, i32) {
    %c0_i32 = arith.constant 0 : i32
    %c0_i32_0 = arith.constant 0 : i32
    %c0_i32_1 = arith.constant 0 : i32
    return %c0_i32, %c0_i32_0 : i32, i32
  }
}

</mosaic_0001>

<llo_original>
// kernel: eq.8
$region0: #{eq.8}
  %s0 = inlined_call_operand.vmem [shape: s32[8,8], index: 0, kind: input, shape index: {}]
  %s1 = inlined_call_operand.vmem [shape: s32[64], index: 1, kind: output, shape index: {}]
  $region1: #{eq.8} parent=0
    #allocation0 [shape = 'u8[4096]{0}', space=vmem, size = 0x1000, scoped, tag = 'scoped mem for output reshape']
    %v2 = vld [vmem:[%s0] sm:$0x1]
    %vm3 = vcmask 64512
    %4 = vst.msk [vmem:[#allocation0] sm:$0x1] %vm3, %v2
    %s5 = scalar_lea.vmem %s0, 7
    %v6 = vld [vmem:[%s5] sm:$0x1]
    %7 = vrot.lane.b32.xlu0 %v6, 56
    %v8 = vpop.permute.xlu0 %7
    %vm9 = vcmask 523712
    %10 = vst.msk [vmem:[#allocation0] sm:$0x1] %vm9, %v8
    %s11 = scalar_lea.vmem %s0, 6
    %v12 = vld [vmem:[%s11] sm:$0x1]
    %13 = vrot.lane.b32.xlu0 %v12, 48
    %v14 = vpop.permute.xlu0 %13
    %vm15 = vcmask 458112
    %16 = vst.msk [vmem:[#allocation0] sm:$0x1] %vm15, %v14
    %s17 = scalar_lea.vmem %s0, 5
    %v18 = vld [vmem:[%s17] sm:$0x1]
    %19 = vrot.lane.b32.xlu0 %v18, 40
    %v20 = vpop.permute.xlu0 %19
    %vm21 = vcmask 392512
    %22 = vst.msk [vmem:[#allocation0] sm:$0x1] %vm21, %v20
    %s23 = scalar_lea.vmem %s0, 4
    %v24 = vld [vmem:[%s23] sm:$0x1]
    %25 = vrot.lane.b32.xlu0 %v24, 32
    %v26 = vpop.permute.xlu0 %25
    %vm27 = vcmask 326912
    %28 = vst.msk [vmem:[#allocation0] sm:$0x1] %vm27, %v26
    %s29 = scalar_lea.vmem %s0, 3
    %v30 = vld [vmem:[%s29] sm:$0x1]
    %31 = vrot.lane.b32.xlu0 %v30, 24
    %v32 = vpop.permute.xlu0 %31
    %vm33 = vcmask 261312
    %34 = vst.msk [vmem:[#allocation0] sm:$0x1] %vm33, %v32
    %s35 = scalar_lea.vmem %s0, 2
    %v36 = vld [vmem:[%s35] sm:$0x1]
    %37 = vrot.lane.b32.xlu0 %v36, 16
    %v38 = vpop.permute.xlu0 %37
    %vm39 = vcmask 195712
    %40 = vst.msk [vmem:[#allocation0] sm:$0x1] %vm39, %v38
    %s41 = scalar_lea.vmem %s0, 1
    %v42 = vld [vmem:[%s41] sm:$0x1]
    %43 = vrot.lane.b32.xlu0 %v42, 8
    %v44 = vpop.permute.xlu0 %43
    %vm45 = vcmask 130112
    %46 = vst.msk [vmem:[#allocation0] sm:$0x1] %vm45, %v44
    %s48 = ssub.s32 2, 1
    %v49 = vld [vmem:[#allocation0] sm:%s48]
    %s51 = ssub.s32 2, 1
    %52 = vst [vmem:[%s1] sm:%s51] %v49

// kernel: gnn_module_forward.1
$region0: #{gnn_module_forward.1}
  #allocation0 [shape = 'u32[]', space=smem, size = 0x4, offset = 0x4, fixed_abs, tag = 'smem constant byte address 0x4 - core index']
  #allocation1 [shape = 'u32[72,128]{1,0:T(1,128)}', space=vmem, size = 0x9000, scoped, tag = 'internal scratch']
  %s0 = inlined_call_operand.vmem [shape: f32[8,8,32], index: 0, kind: input, shape index: {}]
  %s1 = inlined_call_operand.vmem [shape: f32[32,192], index: 1, kind: input, shape index: {}]
  %s2 = inlined_call_operand.vmem [shape: f32[64,192], index: 2, kind: input, shape index: {}]
  %s3 = inlined_call_operand.vmem [shape: f32[1,192], index: 3, kind: input, shape index: {}]
  %s4 = inlined_call_operand.vmem [shape: f32[1,192], index: 4, kind: input, shape index: {}]
  %s5 = inlined_call_operand.vmem [shape: f32[4,64], index: 5, kind: input, shape index: {}]
  %s6 = inlined_call_operand.vmem [shape: f32[4,1], index: 6, kind: input, shape index: {}]
  %s7 = inlined_call_operand.vmem [shape: f32[64,32], index: 7, kind: input, shape index: {}]
  %s8 = inlined_call_operand.vmem [shape: f32[1,32], index: 8, kind: input, shape index: {}]
  %s9 = inlined_call_operand.vmem [shape: f32[32,64], index: 9, kind: input, shape index: {}]
  %s10 = inlined_call_operand.vmem [shape: f32[64,128], index: 10, kind: input, shape index: {}]
  %s11 = inlined_call_operand.hbm [shape: f32[4,32], index: 11, kind: output, shape index: {0}]
  %s12 = inlined_call_operand.vmem [shape: f32[4,128], index: 12, kind: output, shape index: {1}]
  %13 = xla_tuple %s11, %s12
  %s14 = sld [smem:[#allocation0]]
  $region62: #{gnn_module_forward.1} parent=0
    _
  %s16 = ssub.s32 1, %s14
  %s17 = scalar_select 0, %s16, %s14
  $region1: #{gnn_module_forward.1} parent=0
    #allocation2 [shape = 'u8[2048]{0}', space=vmem, size = 0x800, scoped, tag = 'output window, operand 0, single buffered']
    #allocation3 [shape = 's32[1]{0}', space=sflag, size = 0x4, scoped, tag = 'scoped memory for gnn_module_forward.1']
    %18 = vsyncpa [#allocation3], 0
    // Predicated region
    $region2: #{gnn_module_forward.1} parent=1 // pred_check
      _
    $region3: #{gnn_module_forward.1} parent=1 // pred_check_branch
      %20 = sbr.rel (0) target = $region5
    $region4: #{gnn_module_forward.1} parent=1 // pred_region
      _
    $region5: #{gnn_module_forward.1} parent=1 // pred_fallthru
      _
    // Predicated region
    $region6: #{gnn_module_forward.1} parent=1 // pred_check
      _
    $region7: #{gnn_module_forward.1} parent=1 // pred_check_branch
      %22 = sbr.rel (0) target = $region9
    $region8: #{gnn_module_forward.1} parent=1 // pred_region
      _
    $region9: #{gnn_module_forward.1} parent=1 // pred_fallthru
      _
    // Predicated region
    $region10: #{gnn_module_forward.1} parent=1 // pred_check
      _
    $region11: #{gnn_module_forward.1} parent=1 // pred_check_branch
      %24 = sbr.rel (0) target = $region13
    $region12: #{gnn_module_forward.1} parent=1 // pred_region
      _
    $region13: #{gnn_module_forward.1} parent=1 // pred_fallthru
      _
    // Predicated region
    $region14: #{gnn_module_forward.1} parent=1 // pred_check
      _
    $region15: #{gnn_module_forward.1} parent=1 // pred_check_branch
      %26 = sbr.rel (0) target = $region17
    $region16: #{gnn_module_forward.1} parent=1 // pred_region
      _
    $region17: #{gnn_module_forward.1} parent=1 // pred_fallthru
      _
    // Predicated region
    $region18: #{gnn_module_forward.1} parent=1 // pred_check
      _
    $region19: #{gnn_module_forward.1} parent=1 // pred_check_branch
      %28 = sbr.rel (0) target = $region21
    $region20: #{gnn_module_forward.1} parent=1 // pred_region
      _
    $region21: #{gnn_module_forward.1} parent=1 // pred_fallthru
      _
    // Predicated region
    $region22: #{gnn_module_forward.1} parent=1 // pred_check
      _
    $region23: #{gnn_module_forward.1} parent=1 // pred_check_branch
      %30 = sbr.rel (0) target = $region25
    $region24: #{gnn_module_forward.1} parent=1 // pred_region
      _
    $region25: #{gnn_module_forward.1} parent=1 // pred_fallthru
      _
    // Predicated region
    $region26: #{gnn_module_forward.1} parent=1 // pred_check
      _
    $region27: #{gnn_module_forward.1} parent=1 // pred_check_branch
      %32 = sbr.rel (0) target = $region29
    $region28: #{gnn_module_forward.1} parent=1 // pred_region
      _
    $region29: #{gnn_module_forward.1} parent=1 // pred_fallthru
      _
    // Predicated region
    $region30: #{gnn_module_forward.1} parent=1 // pred_check
      _
    $region31: #{gnn_module_forward.1} parent=1 // pred_check_branch
      %34 = sbr.rel (0) target = $region33
    $region32: #{gnn_module_forward.1} parent=1 // pred_region
      _
    $region33: #{gnn_module_forward.1} parent=1 // pred_fallthru
      _
    // Predicated region
    $region34: #{gnn_module_forward.1} parent=1 // pred_check
      _
    $region35: #{gnn_module_forward.1} parent=1 // pred_check_branch
      %36 = sbr.rel (0) target = $region37
    $region36: #{gnn_module_forward.1} parent=1 // pred_region
      _
    $region37: #{gnn_module_forward.1} parent=1 // pred_fallthru
      _
    // Predicated region
    $region38: #{gnn_module_forward.1} parent=1 // pred_check
      _
    $region39: #{gnn_module_forward.1} parent=1 // pred_check_branch
      %38 = sbr.rel (0) target = $region41
    $region40: #{gnn_module_forward.1} parent=1 // pred_region
      _
    $region41: #{gnn_module_forward.1} parent=1 // pred_fallthru
      _
    // Predicated region
    $region42: #{gnn_module_forward.1} parent=1 // pred_check
      _
    $region43: #{gnn_module_forward.1} parent=1 // pred_check_branch
      %40 = sbr.rel (0) target = $region45
    $region44: #{gnn_module_forward.1} parent=1 // pred_region
      _
    $region45: #{gnn_module_forward.1} parent=1 // pred_fallthru
      _
    %v41 = vld [vmem:[%s0] sm:$0xff]
    %v42 = vld [vmem:[%s0 + $0x8] sm:$0xff]
    %v43 = vld [vmem:[%s0 + $0x10] sm:$0xff]
    %v44 = vld [vmem:[%s0 + $0x18] sm:$0xff]
    %v45 = vld [vmem:[%s0 + $0x20] sm:$0xff]
    %v46 = vld [vmem:[%s0 + $0x28] sm:$0xff]
    %v47 = vld [vmem:[%s0 + $0x30] sm:$0xff]
    %v48 = vld [vmem:[%s0 + $0x38] sm:$0xff]
    %v49 = vld [vmem:[%s1] sm:$0xff]
    %v50 = vld [vmem:[%s1 + $0x8] sm:$0xff]
    %v51 = vld [vmem:[%s1 + $0x10] sm:$0xff]
    %v52 = vld [vmem:[%s1 + $0x18] sm:$0xff]
    %v53 = vld [vmem:[%s1 + $0x20] sm:$0xff]
    %v54 = vld [vmem:[%s1 + $0x28] sm:$0xff]
    %v55 = vld [vmem:[%s1 + $0x30] sm:$0xff]
    %v56 = vld [vmem:[%s1 + $0x38] sm:$0xff]
    %v57 = vld [vmem:[%s2] sm:$0xff]
    %v58 = vld [vmem:[%s2 + $0x8] sm:$0xff]
    %v59 = vld [vmem:[%s2 + $0x10] sm:$0xff]
    %v60 = vld [vmem:[%s2 + $0x18] sm:$0xff]
    %v61 = vld [vmem:[%s2 + $0x20] sm:$0xff]
    %v62 = vld [vmem:[%s2 + $0x28] sm:$0xff]
    %v63 = vld [vmem:[%s2 + $0x30] sm:$0xff]
    %v64 = vld [vmem:[%s2 + $0x38] sm:$0xff]
    %v65 = vld [vmem:[%s2 + $0x40] sm:$0xff]
    %v66 = vld [vmem:[%s2 + $0x48] sm:$0xff]
    %v67 = vld [vmem:[%s2 + $0x50] sm:$0xff]
    %v68 = vld [vmem:[%s2 + $0x58] sm:$0xff]
    %v69 = vld [vmem:[%s2 + $0x60] sm:$0xff]
    %v70 = vld [vmem:[%s2 + $0x68] sm:$0xff]
    %v71 = vld [vmem:[%s2 + $0x70] sm:$0xff]
    %v72 = vld [vmem:[%s2 + $0x78] sm:$0xff]
    %v73 = vld [vmem:[%s3] sm:$0x3]
    %v74 = vld [vmem:[%s4] sm:$0x3]
    %v76 = vperm.slane %v73, 0
    %v77 = vperm.slane %v73, 1
    %v88 = vrot.slane %v42, 7
    %vm89 = vcmask 1041409
    %v90 = vsel %vm89, %v88, %v41
    %v91 = vrot.slane %v43, 6
    %vm92 = vcmask 1042434
    %v93 = vsel %vm92, %v91, %v90
    %v94 = vrot.slane %v44, 5
    %vm95 = vcmask 1043459
    %v96 = vsel %vm95, %v94, %v93
    %v97 = vrot.slane %v45, 4
    %vm98 = vcmask 1044484
    %v99 = vsel %vm98, %v97, %v96
    %v100 = vrot.slane %v46, 3
    %vm101 = vcmask 1045509
    %v102 = vsel %vm101, %v100, %v99
    %v103 = vrot.slane %v47, 2
    %vm104 = vcmask 1046534
    %v105 = vsel %vm104, %v103, %v102
    %v106 = vrot.slane %v48, 1
    %vm107 = vcmask 1047559
    %v108 = vsel %vm107, %v106, %v105
    %vm109 = vcmask 261120
    %v110 = vsel %vm109, %v108, 0
    %112 = vmatpush.msra.mxu0 0.0
    %113 = vmatpush.msra.mxu0 0.0
    %114 = vmatpush.msra.mxu0 0.0
    %115 = vmatpush.msra.mxu0 0.0
    %116 = vmatpush.msra.mxu0 0.0
    %117 = vmatpush.msra.mxu0 0.0
    %118 = vmatpush.msra.mxu0 0.0
    %119 = vmatpush.msra.mxu0 0.0
    %120 = vmatpush.msra.mxu0 0.0
    %121 = vmatpush.msra.mxu0 0.0
    %122 = vmatpush.msra.mxu0 0.0
    %123 = vmatpush.msra.mxu0 0.0
    %124 = vmatpush.msra.mxu0 %v55
    %125 = vmatpush.msra.mxu0 %v53
    %126 = vmatpush.msra.mxu0 %v51
    %127 = vmatpush.msra.mxu0 %v49
    %128 = vmatmul.f32.gmra.mxu0 %v110
    %v129 = vpop.f32.mrf.mxu0
    %v130 = vadd.f32 %v76, %v129
    %131 = vdwg.mxu0
    %132 = vmatpush.msra.mxu0 0.0
    %133 = vmatpush.msra.mxu0 0.0
    %134 = vmatpush.msra.mxu0 0.0
    %135 = vmatpush.msra.mxu0 0.0
    %136 = vmatpush.msra.mxu0 0.0
    %137 = vmatpush.msra.mxu0 0.0
    %138 = vmatpush.msra.mxu0 0.0
    %139 = vmatpush.msra.mxu0 0.0
    %140 = vmatpush.msra.mxu0 0.0
    %141 = vmatpush.msra.mxu0 0.0
    %142 = vmatpush.msra.mxu0 0.0
    %143 = vmatpush.msra.mxu0 0.0
    %144 = vmatpush.msra.mxu0 %v56
    %145 = vmatpush.msra.mxu0 %v54
    %146 = vmatpush.msra.mxu0 %v52
    %147 = vmatpush.msra.mxu0 %v50
    %148 = vmatmul.f32.gmra.mxu0 %v110
    %v149 = vpop.f32.mrf.mxu0
    %v150 = vadd.f32 %v77, %v149
    %151 = vdwg.mxu0
    %v153 = vperm.slane %v74, 0
    %v154 = vperm.slane %v74, 1
    %vm157 = vcmask 523264
    %v159 = vsel %vm157, 0.0, 0
    %161 = vmatpush.msra.mxu0 0.0
    %162 = vmatpush.msra.mxu0 0.0
    %163 = vmatpush.msra.mxu0 0.0
    %164 = vmatpush.msra.mxu0 0.0
    %165 = vmatpush.msra.mxu0 0.0
    %166 = vmatpush.msra.mxu0 0.0
    %167 = vmatpush.msra.mxu0 0.0
    %168 = vmatpush.msra.mxu0 0.0
    %169 = vmatpush.msra.mxu0 %v71
    %170 = vmatpush.msra.mxu0 %v69
    %171 = vmatpush.msra.mxu0 %v67
    %172 = vmatpush.msra.mxu0 %v65
    %173 = vmatpush.msra.mxu0 %v63
    %174 = vmatpush.msra.mxu0 %v61
    %175 = vmatpush.msra.mxu0 %v59
    %176 = vmatpush.msra.mxu0 %v57
    %177 = vmatmul.f32.gmra.mxu0 %v159
    %v178 = vpop.f32.mrf.mxu0
    %v179 = vadd.f32 %v153, %v178
    %180 = vdwg.mxu0
    %181 = vmatpush.msra.mxu0 0.0
    %182 = vmatpush.msra.mxu0 0.0
    %183 = vmatpush.msra.mxu0 0.0
    %184 = vmatpush.msra.mxu0 0.0
    %185 = vmatpush.msra.mxu0 0.0
    %186 = vmatpush.msra.mxu0 0.0
    %187 = vmatpush.msra.mxu0 0.0
    %188 = vmatpush.msra.mxu0 0.0
    %189 = vmatpush.msra.mxu0 %v72
    %190 = vmatpush.msra.mxu0 %v70
    %191 = vmatpush.msra.mxu0 %v68
    %192 = vmatpush.msra.mxu0 %v66
    %193 = vmatpush.msra.mxu0 %v64
    %194 = vmatpush.msra.mxu0 %v62
    %195 = vmatpush.msra.mxu0 %v60
    %196 = vmatpush.msra.mxu0 %v58
    %197 = vmatmul.f32.gmra.mxu0 %v159
    %v198 = vpop.f32.mrf.mxu0
    %v199 = vadd.f32 %v154, %v198
    %200 = vdwg.mxu0
    %v201 = vadd.f32 %v130, %v179
    %v202 = vxor.u32 %v201, 2147483648
    %v203 = vmul.f32 %v202, 1.442695
    %v204 = vpow.pop %v203
    %v205 = vadd.f32 %v204, 1.0
    %v206 = vrcp.pop %v205
    %v207 = vmul.f32 %v205, %v206
    %v208 = vsub.f32 1.0, %v207
    %v209 = vmul.f32 %v206, %v208
    %v210 = vadd.f32 %v206, %v209
    %vm211 = vweird.f32 %v205
    %vm212 = vweird.f32 %v206
    %vm213 = vmor %vm211, %vm212
    %v214 = vsel %vm213, %v206, %v210
    %v215 = vand.u32 2147483647, %v205
    %vm216 = vcmp.eq.f32.partialorder %v215, 8.507059e+37
    %v217 = vand.u32 %v205, 2147483648
    %v218 = vor.u32 1.1754944e-38, %v217
    %v219 = vsel %vm216, %v218, %v214
    %v220 = vmul.f32 1.0, %v219
    %v221 = vmul.f32 %v220, %v199
    %v222 = vadd.f32 %v150, %v221
    %v223 = vtanh.pop %v222
    %v224 = vsub.f32 1.0, %v220
    %226 = vrot.lane.b32.xlu0 %v223, 64
    %v227 = vpop.permute.xlu0 %226
    %v229 = vmul.f32 %v224, %v227
    %v230 = vmul.f32 %v220, 0.0
    %v231 = vadd.f32 %v229, %v230
    %v232 = vrot.slane %v41, 1
    %v233 = vsel %vm89, %v42, %v232
    %v234 = vrot.slane %v43, 7
    %v235 = vsel %vm92, %v234, %v233
    %v236 = vrot.slane %v44, 6
    %v237 = vsel %vm95, %v236, %v235
    %v238 = vrot.slane %v45, 5
    %v239 = vsel %vm98, %v238, %v237
    %v240 = vrot.slane %v46, 4
    %v241 = vsel %vm101, %v240, %v239
    %v242 = vrot.slane %v47, 3
    %v243 = vsel %vm104, %v242, %v241
    %v244 = vrot.slane %v48, 2
    %v245 = vsel %vm107, %v244, %v243
    %v246 = vsel %vm109, %v245, 0
    %248 = vmatpush.msra.mxu0 0.0
    %249 = vmatpush.msra.mxu0 0.0
    %250 = vmatpush.msra.mxu0 0.0
    %251 = vmatpush.msra.mxu0 0.0
    %252 = vmatpush.msra.mxu0 0.0
    %253 = vmatpush.msra.mxu0 0.0
    %254 = vmatpush.msra.mxu0 0.0
    %255 = vmatpush.msra.mxu0 0.0
    %256 = vmatpush.msra.mxu0 0.0
    %257 = vmatpush.msra.mxu0 0.0
    %258 = vmatpush.msra.mxu0 0.0
    %259 = vmatpush.msra.mxu0 0.0
    %260 = vmatpush.msra.mxu0 %v55
    %261 = vmatpush.msra.mxu0 %v53
    %262 = vmatpush.msra.mxu0 %v51
    %263 = vmatpush.msra.mxu0 %v49
    %264 = vmatmul.f32.gmra.mxu0 %v246
    %v265 = vpop.f32.mrf.mxu0
    %v266 = vadd.f32 %v76, %v265
    %267 = vdwg.mxu0
    %268 = vmatpush.msra.mxu0 0.0
    %269 = vmatpush.msra.mxu0 0.0
    %270 = vmatpush.msra.mxu0 0.0
    %271 = vmatpush.msra.mxu0 0.0
    %272 = vmatpush.msra.mxu0 0.0
    %273 = vmatpush.msra.mxu0 0.0
    %274 = vmatpush.msra.mxu0 0.0
    %275 = vmatpush.msra.mxu0 0.0
    %276 = vmatpush.msra.mxu0 0.0
    %277 = vmatpush.msra.mxu0 0.0
    %278 = vmatpush.msra.mxu0 0.0
    %279 = vmatpush.msra.mxu0 0.0
    %280 = vmatpush.msra.mxu0 %v56
    %281 = vmatpush.msra.mxu0 %v54
    %282 = vmatpush.msra.mxu0 %v52
    %283 = vmatpush.msra.mxu0 %v50
    %284 = vmatmul.f32.gmra.mxu0 %v246
    %v285 = vpop.f32.mrf.mxu0
    %v286 = vadd.f32 %v77, %v285
    %287 = vdwg.mxu0
    %289 = vrot.lane.b32.xlu0 %v231, 64
    %v290 = vpop.permute.xlu0 %289
    %v291 = vsel %vm157, %v290, 0
    %293 = vmatpush.msra.mxu0 0.0
    %294 = vmatpush.msra.mxu0 0.0
    %295 = vmatpush.msra.mxu0 0.0
    %296 = vmatpush.msra.mxu0 0.0
    %297 = vmatpush.msra.mxu0 0.0
    %298 = vmatpush.msra.mxu0 0.0
    %299 = vmatpush.msra.mxu0 0.0
    %300 = vmatpush.msra.mxu0 0.0
    %301 = vmatpush.msra.mxu0 %v71
    %302 = vmatpush.msra.mxu0 %v69
    %303 = vmatpush.msra.mxu0 %v67
    %304 = vmatpush.msra.mxu0 %v65
    %305 = vmatpush.msra.mxu0 %v63
    %306 = vmatpush.msra.mxu0 %v61
    %307 = vmatpush.msra.mxu0 %v59
    %308 = vmatpush.msra.mxu0 %v57
    %309 = vmatmul.f32.gmra.mxu0 %v291
    %v310 = vpop.f32.mrf.mxu0
    %v311 = vadd.f32 %v153, %v310
    %312 = vdwg.mxu0
    %313 = vmatpush.msra.mxu0 0.0
    %314 = vmatpush.msra.mxu0 0.0
    %315 = vmatpush.msra.mxu0 0.0
    %316 = vmatpush.msra.mxu0 0.0
    %317 = vmatpush.msra.mxu0 0.0
    %318 = vmatpush.msra.mxu0 0.0
    %319 = vmatpush.msra.mxu0 0.0
    %320 = vmatpush.msra.mxu0 0.0
    %321 = vmatpush.msra.mxu0 %v72
    %322 = vmatpush.msra.mxu0 %v70
    %323 = vmatpush.msra.mxu0 %v68
    %324 = vmatpush.msra.mxu0 %v66
    %325 = vmatpush.msra.mxu0 %v64
    %326 = vmatpush.msra.mxu0 %v62
    %327 = vmatpush.msra.mxu0 %v60
    %328 = vmatpush.msra.mxu0 %v58
    %329 = vmatmul.f32.gmra.mxu0 %v291
    %v330 = vpop.f32.mrf.mxu0
    %v331 = vadd.f32 %v154, %v330
    %332 = vdwg.mxu0
    %v333 = vadd.f32 %v266, %v311
    %v334 = vxor.u32 %v333, 2147483648
    %v335 = vmul.f32 %v334, 1.442695
    %v336 = vpow.pop %v335
    %v337 = vadd.f32 %v336, 1.0
    %v338 = vrcp.pop %v337
    %v339 = vmul.f32 %v337, %v338
    %v340 = vsub.f32 1.0, %v339
    %v341 = vmul.f32 %v338, %v340
    %v342 = vadd.f32 %v338, %v341
    %vm343 = vweird.f32 %v337
    %vm344 = vweird.f32 %v338
    %vm345 = vmor %vm343, %vm344
    %v346 = vsel %vm345, %v338, %v342
    %v347 = vand.u32 2147483647, %v337
    %vm348 = vcmp.eq.f32.partialorder %v347, 8.507059e+37
    %v349 = vand.u32 %v337, 2147483648
    %v350 = vor.u32 1.1754944e-38, %v349
    %v351 = vsel %vm348, %v350, %v346
    %v352 = vmul.f32 1.0, %v351
    %v353 = vmul.f32 %v352, %v331
    %v354 = vadd.f32 %v286, %v353
    %v355 = vtanh.pop %v354
    %v356 = vsub.f32 1.0, %v352
    %358 = vrot.lane.b32.xlu0 %v355, 64
    %v359 = vpop.permute.xlu0 %358
    %v361 = vmul.f32 %v356, %v359
    %v362 = vmul.f32 %v352, %v231
    %v363 = vadd.f32 %v361, %v362
    %v364 = vrot.slane %v41, 2
    %v365 = vrot.slane %v42, 1
    %v366 = vsel %vm89, %v365, %v364
    %v367 = vsel %vm92, %v43, %v366
    %v368 = vrot.slane %v44, 7
    %v369 = vsel %vm95, %v368, %v367
    %v370 = vrot.slane %v45, 6
    %v371 = vsel %vm98, %v370, %v369
    %v372 = vrot.slane %v46, 5
    %v373 = vsel %vm101, %v372, %v371
    %v374 = vrot.slane %v47, 4
    %v375 = vsel %vm104, %v374, %v373
    %v376 = vrot.slane %v48, 3
    %v377 = vsel %vm107, %v376, %v375
    %v378 = vsel %vm109, %v377, 0
    %380 = vmatpush.msra.mxu0 0.0
    %381 = vmatpush.msra.mxu0 0.0
    %382 = vmatpush.msra.mxu0 0.0
    %383 = vmatpush.msra.mxu0 0.0
    %384 = vmatpush.msra.mxu0 0.0
    %385 = vmatpush.msra.mxu0 0.0
    %386 = vmatpush.msra.mxu0 0.0
    %387 = vmatpush.msra.mxu0 0.0
    %388 = vmatpush.msra.mxu0 0.0
    %389 = vmatpush.msra.mxu0 0.0
    %390 = vmatpush.msra.mxu0 0.0
    %391 = vmatpush.msra.mxu0 0.0
    %392 = vmatpush.msra.mxu0 %v55
    %393 = vmatpush.msra.mxu0 %v53
    %394 = vmatpush.msra.mxu0 %v51
    %395 = vmatpush.msra.mxu0 %v49
    %396 = vmatmul.f32.gmra.mxu0 %v378
    %v397 = vpop.f32.mrf.mxu0
    %v398 = vadd.f32 %v76, %v397
    %399 = vdwg.mxu0
    %400 = vmatpush.msra.mxu0 0.0
    %401 = vmatpush.msra.mxu0 0.0
    %402 = vmatpush.msra.mxu0 0.0
    %403 = vmatpush.msra.mxu0 0.0
    %404 = vmatpush.msra.mxu0 0.0
    %405 = vmatpush.msra.mxu0 0.0
    %406 = vmatpush.msra.mxu0 0.0
    %407 = vmatpush.msra.mxu0 0.0
    %408 = vmatpush.msra.mxu0 0.0
    %409 = vmatpush.msra.mxu0 0.0
    %410 = vmatpush.msra.mxu0 0.0
    %411 = vmatpush.msra.mxu0 0.0
    %412 = vmatpush.msra.mxu0 %v56
    %413 = vmatpush.msra.mxu0 %v54
    %414 = vmatpush.msra.mxu0 %v52
    %415 = vmatpush.msra.mxu0 %v50
    %416 = vmatmul.f32.gmra.mxu0 %v378
    %v417 = vpop.f32.mrf.mxu0
    %v418 = vadd.f32 %v77, %v417
    %419 = vdwg.mxu0
    %421 = vrot.lane.b32.xlu0 %v363, 64
    %v422 = vpop.permute.xlu0 %421
    %v423 = vsel %vm157, %v422, 0
    %425 = vmatpush.msra.mxu0 0.0
    %426 = vmatpush.msra.mxu0 0.0
    %427 = vmatpush.msra.mxu0 0.0
    %428 = vmatpush.msra.mxu0 0.0
    %429 = vmatpush.msra.mxu0 0.0
    %430 = vmatpush.msra.mxu0 0.0
    %431 = vmatpush.msra.mxu0 0.0
    %432 = vmatpush.msra.mxu0 0.0
    %433 = vmatpush.msra.mxu0 %v71
    %434 = vmatpush.msra.mxu0 %v69
    %435 = vmatpush.msra.mxu0 %v67
    %436 = vmatpush.msra.mxu0 %v65
    %437 = vmatpush.msra.mxu0 %v63
    %438 = vmatpush.msra.mxu0 %v61
    %439 = vmatpush.msra.mxu0 %v59
    %440 = vmatpush.msra.mxu0 %v57
    %441 = vmatmul.f32.gmra.mxu0 %v423
    %v442 = vpop.f32.mrf.mxu0
    %v443 = vadd.f32 %v153, %v442
    %444 = vdwg.mxu0
    %445 = vmatpush.msra.mxu0 0.0
    %446 = vmatpush.msra.mxu0 0.0
    %447 = vmatpush.msra.mxu0 0.0
    %448 = vmatpush.msra.mxu0 0.0
    %449 = vmatpush.msra.mxu0 0.0
    %450 = vmatpush.msra.mxu0 0.0
    %451 = vmatpush.msra.mxu0 0.0
    %452 = vmatpush.msra.mxu0 0.0
    %453 = vmatpush.msra.mxu0 %v72
    %454 = vmatpush.msra.mxu0 %v70
    %455 = vmatpush.msra.mxu0 %v68
    %456 = vmatpush.msra.mxu0 %v66
    %457 = vmatpush.msra.mxu0 %v64
    %458 = vmatpush.msra.mxu0 %v62
    %459 = vmatpush.msra.mxu0 %v60
    %460 = vmatpush.msra.mxu0 %v58
    %461 = vmatmul.f32.gmra.mxu0 %v423
    %v462 = vpop.f32.mrf.mxu0
    %v463 = vadd.f32 %v154, %v462
    %464 = vdwg.mxu0
    %v465 = vadd.f32 %v398, %v443
    %v466 = vxor.u32 %v465, 2147483648
    %v467 = vmul.f32 %v466, 1.442695
    %v468 = vpow.pop %v467
    %v469 = vadd.f32 %v468, 1.0
    %v470 = vrcp.pop %v469
    %v471 = vmul.f32 %v469, %v470
    %v472 = vsub.f32 1.0, %v471
    %v473 = vmul.f32 %v470, %v472
    %v474 = vadd.f32 %v470, %v473
    %vm475 = vweird.f32 %v469
    %vm476 = vweird.f32 %v470
    %vm477 = vmor %vm475, %vm476
    %v478 = vsel %vm477, %v470, %v474
    %v479 = vand.u32 2147483647, %v469
    %vm480 = vcmp.eq.f32.partialorder %v479, 8.507059e+37
    %v481 = vand.u32 %v469, 2147483648
    %v482 = vor.u32 1.1754944e-38, %v481
    %v483 = vsel %vm480, %v482, %v478
    %v484 = vmul.f32 1.0, %v483
    %v485 = vmul.f32 %v484, %v463
    %v486 = vadd.f32 %v418, %v485
    %v487 = vtanh.pop %v486
    %v488 = vsub.f32 1.0, %v484
    %490 = vrot.lane.b32.xlu0 %v487, 64
    %v491 = vpop.permute.xlu0 %490
    %v493 = vmul.f32 %v488, %v491
    %v494 = vmul.f32 %v484, %v363
    %v495 = vadd.f32 %v493, %v494
    %v496 = vrot.slane %v41, 3
    %v497 = vrot.slane %v42, 2
    %v498 = vsel %vm89, %v497, %v496
    %v499 = vrot.slane %v43, 1
    %v500 = vsel %vm92, %v499, %v498
    %v501 = vsel %vm95, %v44, %v500
    %v502 = vrot.slane %v45, 7
    %v503 = vsel %vm98, %v502, %v501
    %v504 = vrot.slane %v46, 6
    %v505 = vsel %vm101, %v504, %v503
    %v506 = vrot.slane %v47, 5
    %v507 = vsel %vm104, %v506, %v505
    %v508 = vrot.slane %v48, 4
    %v509 = vsel %vm107, %v508, %v507
    %v510 = vsel %vm109, %v509, 0
    %512 = vmatpush.msra.mxu0 0.0
    %513 = vmatpush.msra.mxu0 0.0
    %514 = vmatpush.msra.mxu0 0.0
    %515 = vmatpush.msra.mxu0 0.0
    %516 = vmatpush.msra.mxu0 0.0
    %517 = vmatpush.msra.mxu0 0.0
    %518 = vmatpush.msra.mxu0 0.0
    %519 = vmatpush.msra.mxu0 0.0
    %520 = vmatpush.msra.mxu0 0.0
    %521 = vmatpush.msra.mxu0 0.0
    %522 = vmatpush.msra.mxu0 0.0
    %523 = vmatpush.msra.mxu0 0.0
    %524 = vmatpush.msra.mxu0 %v55
    %525 = vmatpush.msra.mxu0 %v53
    %526 = vmatpush.msra.mxu0 %v51
    %527 = vmatpush.msra.mxu0 %v49
    %528 = vmatmul.f32.gmra.mxu0 %v510
    %v529 = vpop.f32.mrf.mxu0
    %v530 = vadd.f32 %v76, %v529
    %531 = vdwg.mxu0
    %532 = vmatpush.msra.mxu0 0.0
    %533 = vmatpush.msra.mxu0 0.0
    %534 = vmatpush.msra.mxu0 0.0
    %535 = vmatpush.msra.mxu0 0.0
    %536 = vmatpush.msra.mxu0 0.0
    %537 = vmatpush.msra.mxu0 0.0
    %538 = vmatpush.msra.mxu0 0.0
    %539 = vmatpush.msra.mxu0 0.0
    %540 = vmatpush.msra.mxu0 0.0
    %541 = vmatpush.msra.mxu0 0.0
    %542 = vmatpush.msra.mxu0 0.0
    %543 = vmatpush.msra.mxu0 0.0
    %544 = vmatpush.msra.mxu0 %v56
    %545 = vmatpush.msra.mxu0 %v54
    %546 = vmatpush.msra.mxu0 %v52
    %547 = vmatpush.msra.mxu0 %v50
    %548 = vmatmul.f32.gmra.mxu0 %v510
    %v549 = vpop.f32.mrf.mxu0
    %v550 = vadd.f32 %v77, %v549
    %551 = vdwg.mxu0
    %553 = vrot.lane.b32.xlu0 %v495, 64
    %v554 = vpop.permute.xlu0 %553
    %v555 = vsel %vm157, %v554, 0
    %557 = vmatpush.msra.mxu0 0.0
    %558 = vmatpush.msra.mxu0 0.0
    %559 = vmatpush.msra.mxu0 0.0
    %560 = vmatpush.msra.mxu0 0.0
    %561 = vmatpush.msra.mxu0 0.0
    %562 = vmatpush.msra.mxu0 0.0
    %563 = vmatpush.msra.mxu0 0.0
    %564 = vmatpush.msra.mxu0 0.0
    %565 = vmatpush.msra.mxu0 %v71
    %566 = vmatpush.msra.mxu0 %v69
    %567 = vmatpush.msra.mxu0 %v67
    %568 = vmatpush.msra.mxu0 %v65
    %569 = vmatpush.msra.mxu0 %v63
    %570 = vmatpush.msra.mxu0 %v61
    %571 = vmatpush.msra.mxu0 %v59
    %572 = vmatpush.msra.mxu0 %v57
    %573 = vmatmul.f32.gmra.mxu0 %v555
    %v574 = vpop.f32.mrf.mxu0
    %v575 = vadd.f32 %v153, %v574
    %576 = vdwg.mxu0
    %577 = vmatpush.msra.mxu0 0.0
    %578 = vmatpush.msra.mxu0 0.0
    %579 = vmatpush.msra.mxu0 0.0
    %580 = vmatpush.msra.mxu0 0.0
    %581 = vmatpush.msra.mxu0 0.0
    %582 = vmatpush.msra.mxu0 0.0
    %583 = vmatpush.msra.mxu0 0.0
    %584 = vmatpush.msra.mxu0 0.0
    %585 = vmatpush.msra.mxu0 %v72
    %586 = vmatpush.msra.mxu0 %v70
    %587 = vmatpush.msra.mxu0 %v68
    %588 = vmatpush.msra.mxu0 %v66
    %589 = vmatpush.msra.mxu0 %v64
    %590 = vmatpush.msra.mxu0 %v62
    %591 = vmatpush.msra.mxu0 %v60
    %592 = vmatpush.msra.mxu0 %v58
    %593 = vmatmul.f32.gmra.mxu0 %v555
    %v594 = vpop.f32.mrf.mxu0
    %v595 = vadd.f32 %v154, %v594
    %596 = vdwg.mxu0
    %v597 = vadd.f32 %v530, %v575
    %v598 = vxor.u32 %v597, 2147483648
    %v599 = vmul.f32 %v598, 1.442695
    %v600 = vpow.pop %v599
    %v601 = vadd.f32 %v600, 1.0
    %v602 = vrcp.pop %v601
    %v603 = vmul.f32 %v601, %v602
    %v604 = vsub.f32 1.0, %v603
    %v605 = vmul.f32 %v602, %v604
    %v606 = vadd.f32 %v602, %v605
    %vm607 = vweird.f32 %v601
    %vm608 = vweird.f32 %v602
    %vm609 = vmor %vm607, %vm608
    %v610 = vsel %vm609, %v602, %v606
    %v611 = vand.u32 2147483647, %v601
    %vm612 = vcmp.eq.f32.partialorder %v611, 8.507059e+37
    %v613 = vand.u32 %v601, 2147483648
    %v614 = vor.u32 1.1754944e-38, %v613
    %v615 = vsel %vm612, %v614, %v610
    %v616 = vmul.f32 1.0, %v615
    %v617 = vmul.f32 %v616, %v595
    %v618 = vadd.f32 %v550, %v617
    %v619 = vtanh.pop %v618
    %v620 = vsub.f32 1.0, %v616
    %622 = vrot.lane.b32.xlu0 %v619, 64
    %v623 = vpop.permute.xlu0 %622
    %v625 = vmul.f32 %v620, %v623
    %v626 = vmul.f32 %v616, %v495
    %v627 = vadd.f32 %v625, %v626
    %v628 = vrot.slane %v41, 4
    %v629 = vrot.slane %v42, 3
    %v630 = vsel %vm89, %v629, %v628
    %v631 = vrot.slane %v43, 2
    %v632 = vsel %vm92, %v631, %v630
    %v633 = vrot.slane %v44, 1
    %v634 = vsel %vm95, %v633, %v632
    %v635 = vsel %vm98, %v45, %v634
    %v636 = vrot.slane %v46, 7
    %v637 = vsel %vm101, %v636, %v635
    %v638 = vrot.slane %v47, 6
    %v639 = vsel %vm104, %v638, %v637
    %v640 = vrot.slane %v48, 5
    %v641 = vsel %vm107, %v640, %v639
    %v642 = vsel %vm109, %v641, 0
    %644 = vmatpush.msra.mxu0 0.0
    %645 = vmatpush.msra.mxu0 0.0
    %646 = vmatpush.msra.mxu0 0.0
    %647 = vmatpush.msra.mxu0 0.0
    %648 = vmatpush.msra.mxu0 0.0
    %649 = vmatpush.msra.mxu0 0.0
    %650 = vmatpush.msra.mxu0 0.0
    %651 = vmatpush.msra.mxu0 0.0
    %652 = vmatpush.msra.mxu0 0.0
    %653 = vmatpush.msra.mxu0 0.0
    %654 = vmatpush.msra.mxu0 0.0
    %655 = vmatpush.msra.mxu0 0.0
    %656 = vmatpush.msra.mxu0 %v55
    %657 = vmatpush.msra.mxu0 %v53
    %658 = vmatpush.msra.mxu0 %v51
    %659 = vmatpush.msra.mxu0 %v49
    %660 = vmatmul.f32.gmra.mxu0 %v642
    %v661 = vpop.f32.mrf.mxu0
    %v662 = vadd.f32 %v76, %v661
    %663 = vdwg.mxu0
    %664 = vmatpush.msra.mxu0 0.0
    %665 = vmatpush.msra.mxu0 0.0
    %666 = vmatpush.msra.mxu0 0.0
    %667 = vmatpush.msra.mxu0 0.0
    %668 = vmatpush.msra.mxu0 0.0
    %669 = vmatpush.msra.mxu0 0.0
    %670 = vmatpush.msra.mxu0 0.0
    %671 = vmatpush.msra.mxu0 0.0
    %672 = vmatpush.msra.mxu0 0.0
    %673 = vmatpush.msra.mxu0 0.0
    %674 = vmatpush.msra.mxu0 0.0
    %675 = vmatpush.msra.mxu0 0.0
    %676 = vmatpush.msra.mxu0 %v56
    %677 = vmatpush.msra.mxu0 %v54
    %678 = vmatpush.msra.mxu0 %v52
    %679 = vmatpush.msra.mxu0 %v50
    %680 = vmatmul.f32.gmra.mxu0 %v642
    %v681 = vpop.f32.mrf.mxu0
    %v682 = vadd.f32 %v77, %v681
    %683 = vdwg.mxu0
    %685 = vrot.lane.b32.xlu0 %v627, 64
    %v686 = vpop.permute.xlu0 %685
    %v687 = vsel %vm157, %v686, 0
    %689 = vmatpush.msra.mxu0 0.0
    %690 = vmatpush.msra.mxu0 0.0
    %691 = vmatpush.msra.mxu0 0.0
    %692 = vmatpush.msra.mxu0 0.0
    %693 = vmatpush.msra.mxu0 0.0
    %694 = vmatpush.msra.mxu0 0.0
    %695 = vmatpush.msra.mxu0 0.0
    %696 = vmatpush.msra.mxu0 0.0
    %697 = vmatpush.msra.mxu0 %v71
    %698 = vmatpush.msra.mxu0 %v69
    %699 = vmatpush.msra.mxu0 %v67
    %700 = vmatpush.msra.mxu0 %v65
    %701 = vmatpush.msra.mxu0 %v63
    %702 = vmatpush.msra.mxu0 %v61
    %703 = vmatpush.msra.mxu0 %v59
    %704 = vmatpush.msra.mxu0 %v57
    %705 = vmatmul.f32.gmra.mxu0 %v687
    %v706 = vpop.f32.mrf.mxu0
    %v707 = vadd.f32 %v153, %v706
    %708 = vdwg.mxu0
    %709 = vmatpush.msra.mxu0 0.0
    %710 = vmatpush.msra.mxu0 0.0
    %711 = vmatpush.msra.mxu0 0.0
    %712 = vmatpush.msra.mxu0 0.0
    %713 = vmatpush.msra.mxu0 0.0
    %714 = vmatpush.msra.mxu0 0.0
    %715 = vmatpush.msra.mxu0 0.0
    %716 = vmatpush.msra.mxu0 0.0
    %717 = vmatpush.msra.mxu0 %v72
    %718 = vmatpush.msra.mxu0 %v70
    %719 = vmatpush.msra.mxu0 %v68
    %720 = vmatpush.msra.mxu0 %v66
    %721 = vmatpush.msra.mxu0 %v64
    %722 = vmatpush.msra.mxu0 %v62
    %723 = vmatpush.msra.mxu0 %v60
    %724 = vmatpush.msra.mxu0 %v58
    %725 = vmatmul.f32.gmra.mxu0 %v687
    %v726 = vpop.f32.mrf.mxu0
    %v727 = vadd.f32 %v154, %v726
    %728 = vdwg.mxu0
    %v729 = vadd.f32 %v662, %v707
    %v730 = vxor.u32 %v729, 2147483648
    %v731 = vmul.f32 %v730, 1.442695
    %v732 = vpow.pop %v731
    %v733 = vadd.f32 %v732, 1.0
    %v734 = vrcp.pop %v733
    %v735 = vmul.f32 %v733, %v734
    %v736 = vsub.f32 1.0, %v735
    %v737 = vmul.f32 %v734, %v736
    %v738 = vadd.f32 %v734, %v737
    %vm739 = vweird.f32 %v733
    %vm740 = vweird.f32 %v734
    %vm741 = vmor %vm739, %vm740
    %v742 = vsel %vm741, %v734, %v738
    %v743 = vand.u32 2147483647, %v733
    %vm744 = vcmp.eq.f32.partialorder %v743, 8.507059e+37
    %v745 = vand.u32 %v733, 2147483648
    %v746 = vor.u32 1.1754944e-38, %v745
    %v747 = vsel %vm744, %v746, %v742
    %v748 = vmul.f32 1.0, %v747
    %v749 = vmul.f32 %v748, %v727
    %v750 = vadd.f32 %v682, %v749
    %v751 = vtanh.pop %v750
    %v752 = vsub.f32 1.0, %v748
    %754 = vrot.lane.b32.xlu0 %v751, 64
    %v755 = vpop.permute.xlu0 %754
    %v757 = vmul.f32 %v752, %v755
    %v758 = vmul.f32 %v748, %v627
    %v759 = vadd.f32 %v757, %v758
    %v760 = vrot.slane %v41, 5
    %v761 = vrot.slane %v42, 4
    %v762 = vsel %vm89, %v761, %v760
    %v763 = vrot.slane %v43, 3
    %v764 = vsel %vm92, %v763, %v762
    %v765 = vrot.slane %v44, 2
    %v766 = vsel %vm95, %v765, %v764
    %v767 = vrot.slane %v45, 1
    %v768 = vsel %vm98, %v767, %v766
    %v769 = vsel %vm101, %v46, %v768
    %v770 = vrot.slane %v47, 7
    %v771 = vsel %vm104, %v770, %v769
    %v772 = vrot.slane %v48, 6
    %v773 = vsel %vm107, %v772, %v771
    %v774 = vsel %vm109, %v773, 0
    %776 = vmatpush.msra.mxu0 0.0
    %777 = vmatpush.msra.mxu0 0.0
    %778 = vmatpush.msra.mxu0 0.0
    %779 = vmatpush.msra.mxu0 0.0
    %780 = vmatpush.msra.mxu0 0.0
    %781 = vmatpush.msra.mxu0 0.0
    %782 = vmatpush.msra.mxu0 0.0
    %783 = vmatpush.msra.mxu0 0.0
    %784 = vmatpush.msra.mxu0 0.0
    %785 = vmatpush.msra.mxu0 0.0
    %786 = vmatpush.msra.mxu0 0.0
    %787 = vmatpush.msra.mxu0 0.0
    %788 = vmatpush.msra.mxu0 %v55
    %789 = vmatpush.msra.mxu0 %v53
    %790 = vmatpush.msra.mxu0 %v51
    %791 = vmatpush.msra.mxu0 %v49
    %792 = vmatmul.f32.gmra.mxu0 %v774
    %v793 = vpop.f32.mrf.mxu0
    %v794 = vadd.f32 %v76, %v793
    %795 = vdwg.mxu0
    %796 = vmatpush.msra.mxu0 0.0
    %797 = vmatpush.msra.mxu0 0.0
    %798 = vmatpush.msra.mxu0 0.0
    %799 = vmatpush.msra.mxu0 0.0
    %800 = vmatpush.msra.mxu0 0.0
    %801 = vmatpush.msra.mxu0 0.0
    %802 = vmatpush.msra.mxu0 0.0
    %803 = vmatpush.msra.mxu0 0.0
    %804 = vmatpush.msra.mxu0 0.0
    %805 = vmatpush.msra.mxu0 0.0
    %806 = vmatpush.msra.mxu0 0.0
    %807 = vmatpush.msra.mxu0 0.0
    %808 = vmatpush.msra.mxu0 %v56
    %809 = vmatpush.msra.mxu0 %v54
    %810 = vmatpush.msra.mxu0 %v52
    %811 = vmatpush.msra.mxu0 %v50
    %812 = vmatmul.f32.gmra.mxu0 %v774
    %v813 = vpop.f32.mrf.mxu0
    %v814 = vadd.f32 %v77, %v813
    %815 = vdwg.mxu0
    %817 = vrot.lane.b32.xlu0 %v759, 64
    %v818 = vpop.permute.xlu0 %817
    %v819 = vsel %vm157, %v818, 0
    %821 = vmatpush.msra.mxu0 0.0
    %822 = vmatpush.msra.mxu0 0.0
    %823 = vmatpush.msra.mxu0 0.0
    %824 = vmatpush.msra.mxu0 0.0
    %825 = vmatpush.msra.mxu0 0.0
    %826 = vmatpush.msra.mxu0 0.0
    %827 = vmatpush.msra.mxu0 0.0
    %828 = vmatpush.msra.mxu0 0.0
    %829 = vmatpush.msra.mxu0 %v71
    %830 = vmatpush.msra.mxu0 %v69
    %831 = vmatpush.msra.mxu0 %v67
    %832 = vmatpush.msra.mxu0 %v65
    %833 = vmatpush.msra.mxu0 %v63
    %834 = vmatpush.msra.mxu0 %v61
    %835 = vmatpush.msra.mxu0 %v59
    %836 = vmatpush.msra.mxu0 %v57
    %837 = vmatmul.f32.gmra.mxu0 %v819
    %v838 = vpop.f32.mrf.mxu0
    %v839 = vadd.f32 %v153, %v838
    %840 = vdwg.mxu0
    %841 = vmatpush.msra.mxu0 0.0
    %842 = vmatpush.msra.mxu0 0.0
    %843 = vmatpush.msra.mxu0 0.0
    %844 = vmatpush.msra.mxu0 0.0
    %845 = vmatpush.msra.mxu0 0.0
    %846 = vmatpush.msra.mxu0 0.0
    %847 = vmatpush.msra.mxu0 0.0
    %848 = vmatpush.msra.mxu0 0.0
    %849 = vmatpush.msra.mxu0 %v72
    %850 = vmatpush.msra.mxu0 %v70
    %851 = vmatpush.msra.mxu0 %v68
    %852 = vmatpush.msra.mxu0 %v66
    %853 = vmatpush.msra.mxu0 %v64
    %854 = vmatpush.msra.mxu0 %v62
    %855 = vmatpush.msra.mxu0 %v60
    %856 = vmatpush.msra.mxu0 %v58
    %857 = vmatmul.f32.gmra.mxu0 %v819
    %v858 = vpop.f32.mrf.mxu0
    %v859 = vadd.f32 %v154, %v858
    %860 = vdwg.mxu0
    %v861 = vadd.f32 %v794, %v839
    %v862 = vxor.u32 %v861, 2147483648
    %v863 = vmul.f32 %v862, 1.442695
    %v864 = vpow.pop %v863
    %v865 = vadd.f32 %v864, 1.0
    %v866 = vrcp.pop %v865
    %v867 = vmul.f32 %v865, %v866
    %v868 = vsub.f32 1.0, %v867
    %v869 = vmul.f32 %v866, %v868
    %v870 = vadd.f32 %v866, %v869
    %vm871 = vweird.f32 %v865
    %vm872 = vweird.f32 %v866
    %vm873 = vmor %vm871, %vm872
    %v874 = vsel %vm873, %v866, %v870
    %v875 = vand.u32 2147483647, %v865
    %vm876 = vcmp.eq.f32.partialorder %v875, 8.507059e+37
    %v877 = vand.u32 %v865, 2147483648
    %v878 = vor.u32 1.1754944e-38, %v877
    %v879 = vsel %vm876, %v878, %v874
    %v880 = vmul.f32 1.0, %v879
    %v881 = vmul.f32 %v880, %v859
    %v882 = vadd.f32 %v814, %v881
    %v883 = vtanh.pop %v882
    %v884 = vsub.f32 1.0, %v880
    %886 = vrot.lane.b32.xlu0 %v883, 64
    %v887 = vpop.permute.xlu0 %886
    %v889 = vmul.f32 %v884, %v887
    %v890 = vmul.f32 %v880, %v759
    %v891 = vadd.f32 %v889, %v890
    %v892 = vrot.slane %v41, 6
    %v893 = vrot.slane %v42, 5
    %v894 = vsel %vm89, %v893, %v892
    %v895 = vrot.slane %v43, 4
    %v896 = vsel %vm92, %v895, %v894
    %v897 = vrot.slane %v44, 3
    %v898 = vsel %vm95, %v897, %v896
    %v899 = vrot.slane %v45, 2
    %v900 = vsel %vm98, %v899, %v898
    %v901 = vrot.slane %v46, 1
    %v902 = vsel %vm101, %v901, %v900
    %v903 = vsel %vm104, %v47, %v902
    %v904 = vrot.slane %v48, 7
    %v905 = vsel %vm107, %v904, %v903
    %v906 = vsel %vm109, %v905, 0
    %908 = vmatpush.msra.mxu0 0.0
    %909 = vmatpush.msra.mxu0 0.0
    %910 = vmatpush.msra.mxu0 0.0
    %911 = vmatpush.msra.mxu0 0.0
    %912 = vmatpush.msra.mxu0 0.0
    %913 = vmatpush.msra.mxu0 0.0
    %914 = vmatpush.msra.mxu0 0.0
    %915 = vmatpush.msra.mxu0 0.0
    %916 = vmatpush.msra.mxu0 0.0
    %917 = vmatpush.msra.mxu0 0.0
    %918 = vmatpush.msra.mxu0 0.0
    %919 = vmatpush.msra.mxu0 0.0
    %920 = vmatpush.msra.mxu0 %v55
    %921 = vmatpush.msra.mxu0 %v53
    %922 = vmatpush.msra.mxu0 %v51
    %923 = vmatpush.msra.mxu0 %v49
    %924 = vmatmul.f32.gmra.mxu0 %v906
    %v925 = vpop.f32.mrf.mxu0
    %v926 = vadd.f32 %v76, %v925
    %927 = vdwg.mxu0
    %928 = vmatpush.msra.mxu0 0.0
    %929 = vmatpush.msra.mxu0 0.0
    %930 = vmatpush.msra.mxu0 0.0
    %931 = vmatpush.msra.mxu0 0.0
    %932 = vmatpush.msra.mxu0 0.0
    %933 = vmatpush.msra.mxu0 0.0
    %934 = vmatpush.msra.mxu0 0.0
    %935 = vmatpush.msra.mxu0 0.0
    %936 = vmatpush.msra.mxu0 0.0
    %937 = vmatpush.msra.mxu0 0.0
    %938 = vmatpush.msra.mxu0 0.0
    %939 = vmatpush.msra.mxu0 0.0
    %940 = vmatpush.msra.mxu0 %v56
    %941 = vmatpush.msra.mxu0 %v54
    %942 = vmatpush.msra.mxu0 %v52
    %943 = vmatpush.msra.mxu0 %v50
    %944 = vmatmul.f32.gmra.mxu0 %v906
    %v945 = vpop.f32.mrf.mxu0
    %v946 = vadd.f32 %v77, %v945
    %947 = vdwg.mxu0
    %949 = vrot.lane.b32.xlu0 %v891, 64
    %v950 = vpop.permute.xlu0 %949
    %v951 = vsel %vm157, %v950, 0
    %953 = vmatpush.msra.mxu0 0.0
    %954 = vmatpush.msra.mxu0 0.0
    %955 = vmatpush.msra.mxu0 0.0
    %956 = vmatpush.msra.mxu0 0.0
    %957 = vmatpush.msra.mxu0 0.0
    %958 = vmatpush.msra.mxu0 0.0
    %959 = vmatpush.msra.mxu0 0.0
    %960 = vmatpush.msra.mxu0 0.0
    %961 = vmatpush.msra.mxu0 %v71
    %962 = vmatpush.msra.mxu0 %v69
    %963 = vmatpush.msra.mxu0 %v67
    %964 = vmatpush.msra.mxu0 %v65
    %965 = vmatpush.msra.mxu0 %v63
    %966 = vmatpush.msra.mxu0 %v61
    %967 = vmatpush.msra.mxu0 %v59
    %968 = vmatpush.msra.mxu0 %v57
    %969 = vmatmul.f32.gmra.mxu0 %v951
    %v970 = vpop.f32.mrf.mxu0
    %v971 = vadd.f32 %v153, %v970
    %972 = vdwg.mxu0
    %973 = vmatpush.msra.mxu0 0.0
    %974 = vmatpush.msra.mxu0 0.0
    %975 = vmatpush.msra.mxu0 0.0
    %976 = vmatpush.msra.mxu0 0.0
    %977 = vmatpush.msra.mxu0 0.0
    %978 = vmatpush.msra.mxu0 0.0
    %979 = vmatpush.msra.mxu0 0.0
    %980 = vmatpush.msra.mxu0 0.0
    %981 = vmatpush.msra.mxu0 %v72
    %982 = vmatpush.msra.mxu0 %v70
    %983 = vmatpush.msra.mxu0 %v68
    %984 = vmatpush.msra.mxu0 %v66
    %985 = vmatpush.msra.mxu0 %v64
    %986 = vmatpush.msra.mxu0 %v62
    %987 = vmatpush.msra.mxu0 %v60
    %988 = vmatpush.msra.mxu0 %v58
    %989 = vmatmul.f32.gmra.mxu0 %v951
    %v990 = vpop.f32.mrf.mxu0
    %v991 = vadd.f32 %v154, %v990
    %992 = vdwg.mxu0
    %v993 = vadd.f32 %v926, %v971
    %v994 = vxor.u32 %v993, 2147483648
    %v995 = vmul.f32 %v994, 1.442695
    %v996 = vpow.pop %v995
    %v997 = vadd.f32 %v996, 1.0
    %v998 = vrcp.pop %v997
    %v999 = vmul.f32 %v997, %v998
    %v1000 = vsub.f32 1.0, %v999
    %v1001 = vmul.f32 %v998, %v1000
    %v1002 = vadd.f32 %v998, %v1001
    %vm1003 = vweird.f32 %v997
    %vm1004 = vweird.f32 %v998
    %vm1005 = vmor %vm1003, %vm1004
    %v1006 = vsel %vm1005, %v998, %v1002
    %v1007 = vand.u32 2147483647, %v997
    %vm1008 = vcmp.eq.f32.partialorder %v1007, 8.507059e+37
    %v1009 = vand.u32 %v997, 2147483648
    %v1010 = vor.u32 1.1754944e-38, %v1009
    %v1011 = vsel %vm1008, %v1010, %v1006
    %v1012 = vmul.f32 1.0, %v1011
    %v1013 = vmul.f32 %v1012, %v991
    %v1014 = vadd.f32 %v946, %v1013
    %v1015 = vtanh.pop %v1014
    %v1016 = vsub.f32 1.0, %v1012
    %1018 = vrot.lane.b32.xlu0 %v1015, 64
    %v1019 = vpop.permute.xlu0 %1018
    %v1021 = vmul.f32 %v1016, %v1019
    %v1022 = vmul.f32 %v1012, %v891
    %v1023 = vadd.f32 %v1021, %v1022
    %v1024 = vrot.slane %v41, 7
    %v1025 = vrot.slane %v42, 6
    %v1026 = vsel %vm89, %v1025, %v1024
    %v1027 = vrot.slane %v43, 5
    %v1028 = vsel %vm92, %v1027, %v1026
    %v1029 = vrot.slane %v44, 4
    %v1030 = vsel %vm95, %v1029, %v1028
    %v1031 = vrot.slane %v45, 3
    %v1032 = vsel %vm98, %v1031, %v1030
    %v1033 = vrot.slane %v46, 2
    %v1034 = vsel %vm101, %v1033, %v1032
    %v1035 = vrot.slane %v47, 1
    %v1036 = vsel %vm104, %v1035, %v1034
    %v1037 = vsel %vm107, %v48, %v1036
    %v1038 = vsel %vm109, %v1037, 0
    %1040 = vmatpush.msra.mxu0 0.0
    %1041 = vmatpush.msra.mxu0 0.0
    %1042 = vmatpush.msra.mxu0 0.0
    %1043 = vmatpush.msra.mxu0 0.0
    %1044 = vmatpush.msra.mxu0 0.0
    %1045 = vmatpush.msra.mxu0 0.0
    %1046 = vmatpush.msra.mxu0 0.0
    %1047 = vmatpush.msra.mxu0 0.0
    %1048 = vmatpush.msra.mxu0 0.0
    %1049 = vmatpush.msra.mxu0 0.0
    %1050 = vmatpush.msra.mxu0 0.0
    %1051 = vmatpush.msra.mxu0 0.0
    %1052 = vmatpush.msra.mxu0 %v55
    %1053 = vmatpush.msra.mxu0 %v53
    %1054 = vmatpush.msra.mxu0 %v51
    %1055 = vmatpush.msra.mxu0 %v49
    %1056 = vmatmul.f32.gmra.mxu0 %v1038
    %v1057 = vpop.f32.mrf.mxu0
    %v1058 = vadd.f32 %v76, %v1057
    %1059 = vdwg.mxu0
    %1060 = vmatpush.msra.mxu0 0.0
    %1061 = vmatpush.msra.mxu0 0.0
    %1062 = vmatpush.msra.mxu0 0.0
    %1063 = vmatpush.msra.mxu0 0.0
    %1064 = vmatpush.msra.mxu0 0.0
    %1065 = vmatpush.msra.mxu0 0.0
    %1066 = vmatpush.msra.mxu0 0.0
    %1067 = vmatpush.msra.mxu0 0.0
    %1068 = vmatpush.msra.mxu0 0.0
    %1069 = vmatpush.msra.mxu0 0.0
    %1070 = vmatpush.msra.mxu0 0.0
    %1071 = vmatpush.msra.mxu0 0.0
    %1072 = vmatpush.msra.mxu0 %v56
    %1073 = vmatpush.msra.mxu0 %v54
    %1074 = vmatpush.msra.mxu0 %v52
    %1075 = vmatpush.msra.mxu0 %v50
    %1076 = vmatmul.f32.gmra.mxu0 %v1038
    %v1077 = vpop.f32.mrf.mxu0
    %v1078 = vadd.f32 %v77, %v1077
    %1079 = vdwg.mxu0
    %1081 = vrot.lane.b32.xlu0 %v1023, 64
    %v1082 = vpop.permute.xlu0 %1081
    %v1083 = vsel %vm157, %v1082, 0
    %1085 = vmatpush.msra.mxu0 0.0
    %1086 = vmatpush.msra.mxu0 0.0
    %1087 = vmatpush.msra.mxu0 0.0
    %1088 = vmatpush.msra.mxu0 0.0
    %1089 = vmatpush.msra.mxu0 0.0
    %1090 = vmatpush.msra.mxu0 0.0
    %1091 = vmatpush.msra.mxu0 0.0
    %1092 = vmatpush.msra.mxu0 0.0
    %1093 = vmatpush.msra.mxu0 %v71
    %1094 = vmatpush.msra.mxu0 %v69
    %1095 = vmatpush.msra.mxu0 %v67
    %1096 = vmatpush.msra.mxu0 %v65
    %1097 = vmatpush.msra.mxu0 %v63
    %1098 = vmatpush.msra.mxu0 %v61
    %1099 = vmatpush.msra.mxu0 %v59
    %1100 = vmatpush.msra.mxu0 %v57
    %1101 = vmatmul.f32.gmra.mxu0 %v1083
    %v1102 = vpop.f32.mrf.mxu0
    %v1103 = vadd.f32 %v153, %v1102
    %1104 = vdwg.mxu0
    %1105 = vmatpush.msra.mxu0 0.0
    %1106 = vmatpush.msra.mxu0 0.0
    %1107 = vmatpush.msra.mxu0 0.0
    %1108 = vmatpush.msra.mxu0 0.0
    %1109 = vmatpush.msra.mxu0 0.0
    %1110 = vmatpush.msra.mxu0 0.0
    %1111 = vmatpush.msra.mxu0 0.0
    %1112 = vmatpush.msra.mxu0 0.0
    %1113 = vmatpush.msra.mxu0 %v72
    %1114 = vmatpush.msra.mxu0 %v70
    %1115 = vmatpush.msra.mxu0 %v68
    %1116 = vmatpush.msra.mxu0 %v66
    %1117 = vmatpush.msra.mxu0 %v64
    %1118 = vmatpush.msra.mxu0 %v62
    %1119 = vmatpush.msra.mxu0 %v60
    %1120 = vmatpush.msra.mxu0 %v58
    %1121 = vmatmul.f32.gmra.mxu0 %v1083
    %v1122 = vpop.f32.mrf.mxu0
    %v1123 = vadd.f32 %v154, %v1122
    %1124 = vdwg.mxu0
    %v1125 = vadd.f32 %v1058, %v1103
    %v1126 = vxor.u32 %v1125, 2147483648
    %v1127 = vmul.f32 %v1126, 1.442695
    %v1128 = vpow.pop %v1127
    %v1129 = vadd.f32 %v1128, 1.0
    %v1130 = vrcp.pop %v1129
    %v1131 = vmul.f32 %v1129, %v1130
    %v1132 = vsub.f32 1.0, %v1131
    %v1133 = vmul.f32 %v1130, %v1132
    %v1134 = vadd.f32 %v1130, %v1133
    %vm1135 = vweird.f32 %v1129
    %vm1136 = vweird.f32 %v1130
    %vm1137 = vmor %vm1135, %vm1136
    %v1138 = vsel %vm1137, %v1130, %v1134
    %v1139 = vand.u32 2147483647, %v1129
    %vm1140 = vcmp.eq.f32.partialorder %v1139, 8.507059e+37
    %v1141 = vand.u32 %v1129, 2147483648
    %v1142 = vor.u32 1.1754944e-38, %v1141
    %v1143 = vsel %vm1140, %v1142, %v1138
    %v1144 = vmul.f32 1.0, %v1143
    %v1145 = vmul.f32 %v1144, %v1123
    %v1146 = vadd.f32 %v1078, %v1145
    %v1147 = vtanh.pop %v1146
    %v1148 = vsub.f32 1.0, %v1144
    %1150 = vrot.lane.b32.xlu0 %v1147, 64
    %v1151 = vpop.permute.xlu0 %1150
    %v1153 = vmul.f32 %v1148, %v1151
    %v1154 = vmul.f32 %v1144, %v1023
    %v1155 = vadd.f32 %v1153, %v1154
    %v1156 = vld [vmem:[%s5] sm:$0xf]
    %1158 = vrot.lane.b32.xlu0 %v1155, 64
    %v1159 = vpop.permute.xlu0 %1158
    %v1169 = vsel %vm157, %v1156, 0
    %1171 = vmatpush.msra.mxu0 0.0
    %1172 = vmatpush.msra.mxu0 0.0
    %1173 = vmatpush.msra.mxu0 0.0
    %1174 = vmatpush.msra.mxu0 0.0
    %1175 = vmatpush.msra.mxu0 0.0
    %1176 = vmatpush.msra.mxu0 0.0
    %1177 = vmatpush.msra.mxu0 0.0
    %1178 = vmatpush.msra.mxu0 0.0
    %1179 = vmatpush.msra.mxu0 %v1159
    %1180 = vmatpush.msra.mxu0 %v1082
    %1181 = vmatpush.msra.mxu0 %v950
    %1182 = vmatpush.msra.mxu0 %v818
    %1183 = vmatpush.msra.mxu0 %v686
    %1184 = vmatpush.msra.mxu0 %v554
    %1185 = vmatpush.msra.mxu0 %v422
    %1186 = vmatpush.msra.mxu0 %v290
    %1187 = vmatmul.f32.gmra.mxu0 %v1169
    %v1188 = vpop.f32.mrf.mxu0
    %v1189 = vadd.f32 0.0, %v1188
    %1190 = vdwg.mxu0
    %v1191 = vld [vmem:[%s7] sm:$0xff]
    %v1192 = vld [vmem:[%s7 + $0x8] sm:$0xff]
    %v1193 = vld [vmem:[%s7 + $0x10] sm:$0xff]
    %v1194 = vld [vmem:[%s7 + $0x18] sm:$0xff]
    %v1195 = vld [vmem:[%s7 + $0x20] sm:$0xff]
    %v1196 = vld [vmem:[%s7 + $0x28] sm:$0xff]
    %v1197 = vld [vmem:[%s7 + $0x30] sm:$0xff]
    %v1198 = vld [vmem:[%s7 + $0x38] sm:$0xff]
    %v1199 = vld [vmem:[%s8] sm:$0x1]
    %v1201 = vperm.slane %v1199, 0
    %v1204 = vsel %vm157, %v1189, 0
    %1206 = vmatpush.msra.mxu0 0.0
    %1207 = vmatpush.msra.mxu0 0.0
    %1208 = vmatpush.msra.mxu0 0.0
    %1209 = vmatpush.msra.mxu0 0.0
    %1210 = vmatpush.msra.mxu0 0.0
    %1211 = vmatpush.msra.mxu0 0.0
    %1212 = vmatpush.msra.mxu0 0.0
    %1213 = vmatpush.msra.mxu0 0.0
    %1214 = vmatpush.msra.mxu0 %v1198
    %1215 = vmatpush.msra.mxu0 %v1197
    %1216 = vmatpush.msra.mxu0 %v1196
    %1217 = vmatpush.msra.mxu0 %v1195
    %1218 = vmatpush.msra.mxu0 %v1194
    %1219 = vmatpush.msra.mxu0 %v1193
    %1220 = vmatpush.msra.mxu0 %v1192
    %1221 = vmatpush.msra.mxu0 %v1191
    %1222 = vmatmul.f32.gmra.mxu0 %v1204
    %v1223 = vpop.f32.mrf.mxu0
    %v1224 = vadd.f32 %v1201, %v1223
    %1225 = vdwg.mxu0
    %v1226 = vld [vmem:[%s6] sm:$0xf]
    %1228 = vset.pattern.permute.xlu0 0
    %1229 = vperm.xlu0 %1228, %v1226
    %v1230 = vpop.permute.xlu0 %1229
    %v1232 = vmul.f32 %v1224, %v1230
    %vm1233 = vcmask 257024
    %1234 = vst.msk [vmem:[#allocation2] sm:$0xf] %vm1233, %v1232
    %v1235 = vld [vmem:[%s9] sm:$0xff]
    %v1236 = vld [vmem:[%s9 + $0x8] sm:$0xff]
    %v1237 = vld [vmem:[%s9 + $0x10] sm:$0xff]
    %v1238 = vld [vmem:[%s9 + $0x18] sm:$0xff]
    %v1240 = vsel %vm109, %v1232, 0
    %1242 = vmatpush.msra.mxu0 0.0
    %1243 = vmatpush.msra.mxu0 0.0
    %1244 = vmatpush.msra.mxu0 0.0
    %1245 = vmatpush.msra.mxu0 0.0
    %1246 = vmatpush.msra.mxu0 0.0
    %1247 = vmatpush.msra.mxu0 0.0
    %1248 = vmatpush.msra.mxu0 0.0
    %1249 = vmatpush.msra.mxu0 0.0
    %1250 = vmatpush.msra.mxu0 0.0
    %1251 = vmatpush.msra.mxu0 0.0
    %1252 = vmatpush.msra.mxu0 0.0
    %1253 = vmatpush.msra.mxu0 0.0
    %1254 = vmatpush.msra.mxu0 %v1238
    %1255 = vmatpush.msra.mxu0 %v1237
    %1256 = vmatpush.msra.mxu0 %v1236
    %1257 = vmatpush.msra.mxu0 %v1235
    %1258 = vmatmul.f32.gmra.mxu0 %v1240
    %v1259 = vpop.f32.mrf.mxu0
    %v1260 = vadd.f32 0.0, %v1259
    %1261 = vdwg.mxu0
    %v1262 = vxor.u32 %v1260, 2147483648
    %v1263 = vmul.f32 %v1262, 1.442695
    %v1264 = vpow.pop %v1263
    %v1265 = vadd.f32 %v1264, 1.0
    %v1266 = vrcp.pop %v1265
    %v1267 = vmul.f32 %v1265, %v1266
    %v1268 = vsub.f32 1.0, %v1267
    %v1269 = vmul.f32 %v1266, %v1268
    %v1270 = vadd.f32 %v1266, %v1269
    %vm1271 = vweird.f32 %v1265
    %vm1272 = vweird.f32 %v1266
    %vm1273 = vmor %vm1271, %vm1272
    %v1274 = vsel %vm1273, %v1266, %v1270
    %v1275 = vand.u32 2147483647, %v1265
    %vm1276 = vcmp.eq.f32.partialorder %v1275, 8.507059e+37
    %v1277 = vand.u32 %v1265, 2147483648
    %v1278 = vor.u32 1.1754944e-38, %v1277
    %v1279 = vsel %vm1276, %v1278, %v1274
    %v1280 = vmul.f32 1.0, %v1279
    %v1281 = vld [vmem:[%s10] sm:$0xff]
    %v1282 = vld [vmem:[%s10 + $0x8] sm:$0xff]
    %v1283 = vld [vmem:[%s10 + $0x10] sm:$0xff]
    %v1284 = vld [vmem:[%s10 + $0x18] sm:$0xff]
    %v1285 = vld [vmem:[%s10 + $0x20] sm:$0xff]
    %v1286 = vld [vmem:[%s10 + $0x28] sm:$0xff]
    %v1287 = vld [vmem:[%s10 + $0x30] sm:$0xff]
    %v1288 = vld [vmem:[%s10 + $0x38] sm:$0xff]
    %v1290 = vsel %vm157, %v1280, 0
    %1292 = vmatpush.msra.mxu0 0.0
    %1293 = vmatpush.msra.mxu0 0.0
    %1294 = vmatpush.msra.mxu0 0.0
    %1295 = vmatpush.msra.mxu0 0.0
    %1296 = vmatpush.msra.mxu0 0.0
    %1297 = vmatpush.msra.mxu0 0.0
    %1298 = vmatpush.msra.mxu0 0.0
    %1299 = vmatpush.msra.mxu0 0.0
    %1300 = vmatpush.msra.mxu0 %v1288
    %1301 = vmatpush.msra.mxu0 %v1287
    %1302 = vmatpush.msra.mxu0 %v1286
    %1303 = vmatpush.msra.mxu0 %v1285
    %1304 = vmatpush.msra.mxu0 %v1284
    %1305 = vmatpush.msra.mxu0 %v1283
    %1306 = vmatpush.msra.mxu0 %v1282
    %1307 = vmatpush.msra.mxu0 %v1281
    %1308 = vmatmul.f32.gmra.mxu0 %v1290
    %v1309 = vpop.f32.mrf.mxu0
    %v1310 = vadd.f32 0.0, %v1309
    %1311 = vdwg.mxu0
    %1312 = vst [vmem:[%s12] sm:$0xf] %v1310
    // Predicated region
    $region46: #{gnn_module_forward.1} parent=1 // pred_check
      _
    $region47: #{gnn_module_forward.1} parent=1 // pred_check_branch
      %1314 = sbr.rel (0) target = $region49
    $region48: #{gnn_module_forward.1} parent=1 // pred_region
      %1316 = vsyncadd [#allocation3], 0
      %s1318 = sshll.u32 [#allocation2], 4
      %s1319 = int_to_ptr.vmem [resolvable:$true] %s1318
      %s1320 = sshll.u32 %s11, 4
      %s1321 = int_to_ptr.hbm [resolvable:$true] %s1320
      %1323 = dma.vmem_to_hbm [thread:$0]  %s1319, 64, %s1321, [#allocation3]
    $region49: #{gnn_module_forward.1} parent=1 // pred_fallthru
      _
    // Predicated region
    $region50: #{gnn_module_forward.1} parent=1 // pred_check
      _
    $region51: #{gnn_module_forward.1} parent=1 // pred_check_branch
      %1325 = sbr.rel (0) target = $region53
    $region52: #{gnn_module_forward.1} parent=1 // pred_region
      _
    $region53: #{gnn_module_forward.1} parent=1 // pred_fallthru
      _
    // Predicated region
    $region54: #{gnn_module_forward.1} parent=1 // pred_check
      _
    $region55: #{gnn_module_forward.1} parent=1 // pred_check_branch
      %1327 = sbr.rel (0) target = $region57
    $region56: #{gnn_module_forward.1} parent=1 // pred_region
      %1329 = dma.done [#allocation3], 64
    $region57: #{gnn_module_forward.1} parent=1 // pred_fallthru
      _
    // Predicated region
    $region58: #{gnn_module_forward.1} parent=1 // pred_check
      _
    $region59: #{gnn_module_forward.1} parent=1 // pred_check_branch
      %1331 = sbr.rel (0) target = $region61
    $region60: #{gnn_module_forward.1} parent=1 // pred_region
      _
    $region61: #{gnn_module_forward.1} parent=1 // pred_fallthru
      _
    %1332 = vsyncpa [#allocation3], 1

</llo_original>
